<compile_context>
chip_gen: v6e
topology: v6e:2x2x1
jax: 0.10.0
libtpu: 0.0.40
codegen_flags: <defaults>
</compile_context>

<pallas_src>
import jax
import jax.numpy as jnp
from jax import lax
from jax.experimental import pallas as pl
from jax.experimental.pallas import tpu as pltpu

_BN_EPS = 1e-5
_AGG_EPS = 1e-6


# ------------------------------- kernel body --------------------------------
def _gcao_body(node, edge, src_idx, dst_idx, w_fused, b_fused, w_eg, b_eg):
    """One EdgeGatedGraphConv step, fully resident in vregs/VMEM.

    node: (N, D) f32, edge: (E, D) f32, src_idx/dst_idx: (E, 1) i32.
    w_fused: (D, 4D) packed as [src_gate | dst_gate | dst_update | src_update].
    """
    f32 = jnp.float32
    n, d = node.shape
    e = edge.shape[0]

    # Fused lane-dense node projection: one (N, D) @ (D, 4D) MXU pass.
    node_proj = jnp.dot(node, w_fused, preferred_element_type=f32) + b_fused
    e_src_n = node_proj[:, 0 * d:1 * d]    # src_gate(h)
    e_dst_n = node_proj[:, 1 * d:2 * d]    # dst_gate(h)
    dst_upd = node_proj[:, 2 * d:3 * d]    # dst_update(h)
    src_upd = node_proj[:, 3 * d:4 * d]    # src_update(h)

    e_gate = jnp.dot(edge, w_eg, preferred_element_type=f32) + b_eg

    # In-kernel incidence matrices (nothing O(E*N) ever touches HBM).
    iota_n = lax.broadcasted_iota(jnp.int32, (e, n), 1)           # (E, N)
    src_oh = (iota_n == src_idx).astype(f32)                      # (E, N)
    iota_2n = lax.broadcasted_iota(jnp.int32, (e, 2 * n), 1)      # (E, 2N)
    comb_oh = jnp.logical_or(iota_2n == src_idx,
                             iota_2n == (dst_idx + n)).astype(f32)

    # Fused gather: one (E, 2N) @ (2N, 2D) contraction yields BOTH
    #   col block [0:D]  = src_gate(h)[src] + dst_gate(h)[dst]
    #   col block [D:2D] = dst_update(h)[dst]
    zeros_nd = jnp.zeros_like(e_src_n)
    stacked = jnp.concatenate(
        [jnp.concatenate([e_src_n, zeros_nd], axis=1),
         jnp.concatenate([e_dst_n, dst_upd], axis=1)], axis=0)    # (2N, 2D)
    gathered = jnp.dot(comb_oh, stacked, preferred_element_type=f32)  # (E, 2D)

    m = gathered[:, :d] + e_gate
    bh = gathered[:, d:]
    sigma = jax.nn.sigmoid(m)

    # Scatter (segment-sum over src): contract the E axis of src_oh directly;
    # numerator and denominator packed into one 64-lane payload.
    payload = jnp.concatenate([sigma * bh, sigma], axis=1)        # (E, 2D)
    sums = lax.dot_general(src_oh, payload,
                           dimension_numbers=(((0,), (0,)), ((), ())),
                           preferred_element_type=f32)            # (N, 2D)
    sum_sigma_h = sums[:, :d]
    sum_sigma = sums[:, d:]

    # EUP approximate reciprocal seed + one Newton step: keeps the divide off
    # the VALU while preserving ~f32 accuracy for the tolerance check.
    denom = sum_sigma + _AGG_EPS
    r = pl.reciprocal(denom, approx=True)
    r = r * (2.0 - denom * r)
    h_agg = sum_sigma_h * r

    # BatchNorm1d eval mode with default running stats (mean=0, var=1).
    bn_scale = 1.0 / jnp.sqrt(1.0 + _BN_EPS)
    node_out = node + jax.nn.silu((src_upd + h_agg) * bn_scale)
    edge_out = edge + jax.nn.silu(m * bn_scale)
    return node_out, edge_out


def _gcpnet_update_kernel(atom_ref, bond_ref, trip_ref,
                          a_src_ref, a_dst_ref, e_src_ref, e_dst_ref,
                          w1_ref, b1_ref, weg1_ref, beg1_ref,
                          w2_ref, b2_ref, weg2_ref, beg2_ref,
                          atom_out_ref, bond_out_ref, trip_out_ref):
    # Step 1: bondAndAngleUpdate (nodes = bonds, edges = triplets / angles).
    bond_mid, trip_out = _gcao_body(
        bond_ref[...], trip_ref[...], a_src_ref[...], a_dst_ref[...],
        w1_ref[...], b1_ref[...], weg1_ref[...], beg1_ref[...])
    # Step 2: bondAndAtomUpdate (nodes = atoms, edges = bonds) on fresh bond feats.
    atom_out, bond_out = _gcao_body(
        atom_ref[...], bond_mid, e_src_ref[...], e_dst_ref[...],
        w2_ref[...], b2_ref[...], weg2_ref[...], beg2_ref[...])
    atom_out_ref[...] = atom_out
    bond_out_ref[...] = bond_out
    trip_out_ref[...] = trip_out


# --------------------------------- wrapper ----------------------------------
def _pack_gcao(p):
    w = jnp.concatenate([p["w_src_gate"], p["w_dst_gate"],
                         p["w_dst_update"], p["w_src_update"]], axis=1)   # (D, 4D)
    b = jnp.concatenate([p["b_src_gate"], p["b_dst_gate"],
                         p["b_dst_update"], p["b_src_update"]], axis=1)   # (1, 4D)
    return w, b


def _cost_estimate(a, b, t, d):
    def gcao(n, e):
        fl = (2 * n * d * 4 * d            # fused node linear
              + 2 * e * d * d              # edge-gate linear
              + 2 * e * 2 * n * 2 * d      # fused src+dst gather (gates + dst_update)
              + 2 * e * n * 2 * d          # scatter (numerator + denominator)
              + 12 * (e * d + n * d))      # elementwise
        tr = 2 * e * d + 3 * n * d         # sigmoid, 2x silu, reciprocal
        return fl, tr

    f1, t1 = gcao(b, t)
    f2, t2 = gcao(a, b)
    nbytes = 4 * (2 * (a + b + t) * d + b * d
                  + 2 * (d * 4 * d + 4 * d + d * d + d)
                  + 2 * (t + b))
    return pl.CostEstimate(flops=f1 + f2, transcendentals=t1 + t2,
                           bytes_accessed=nbytes)


def gcpnet_update(params, atom_feats, bond_attr, triplet_feats, edge_index, angle_index):
    """Forward of GCPNetUpdate: returns (atom_feats, bond_attr, triplet_feats)."""
    a, d = atom_feats.shape
    b = bond_attr.shape[0]
    t = triplet_feats.shape[0]

    w1, b1 = _pack_gcao(params["bondAndAngleUpdate"])
    w2, b2 = _pack_gcao(params["bondAndAtomUpdate"])

    a_src = angle_index[0].astype(jnp.int32).reshape(t, 1)
    a_dst = angle_index[1].astype(jnp.int32).reshape(t, 1)
    e_src = edge_index[0].astype(jnp.int32).reshape(b, 1)
    e_dst = edge_index[1].astype(jnp.int32).reshape(b, 1)

    inputs = (atom_feats, bond_attr, triplet_feats,
              a_src, a_dst, e_src, e_dst,
              w1, b1,
              params["bondAndAngleUpdate"]["w_edge_gate"],
              params["bondAndAngleUpdate"]["b_edge_gate"],
              w2, b2,
              params["bondAndAtomUpdate"]["w_edge_gate"],
              params["bondAndAtomUpdate"]["b_edge_gate"])

    vmem = pl.BlockSpec(memory_space=pltpu.MemorySpace.VMEM)
    atom_out, bond_out, trip_out = pl.pallas_call(
        _gcpnet_update_kernel,
        out_shape=(jax.ShapeDtypeStruct((a, d), jnp.float32),
                   jax.ShapeDtypeStruct((b, d), jnp.float32),
                   jax.ShapeDtypeStruct((t, d), jnp.float32)),
        in_specs=[vmem] * len(inputs),
        out_specs=(vmem, vmem, vmem),
        compiler_params=pltpu.CompilerParams(
            vmem_limit_bytes=32 * 1024 * 1024),   # explicit budget (safe on v7x 64 MiB)
        cost_estimate=_cost_estimate(a, b, t, d),
    )(*inputs)
    return atom_out, bond_out, trip_out


# ----------------------------- parameter init --------------------------------
def init_gcao_params(key, dim):
    names = ("src_gate", "dst_gate", "edge_gate", "src_update", "dst_update")
    keys = jax.random.split(key, 2 * len(names))
    scale = 1.0 / jnp.sqrt(dim)
    params = {}
    for i, nm in enumerate(names):
        params[f"w_{nm}"] = jax.random.uniform(
            keys[2 * i], (dim, dim), jnp.float32, -scale, scale)
        params[f"b_{nm}"] = jax.random.uniform(
            keys[2 * i + 1], (1, dim), jnp.float32, -scale, scale)
    return params


# ------------------------- pure-JAX reference (check) ------------------------
def _gcao_ref(params, node, edge_index, edge):
    n = node.shape[0]
    src, dst = edge_index[0], edge_index[1]
    lin = lambda x, nm: x @ params[f"w_{nm}"] + params[f"b_{nm}"]
    m = lin(node, "src_gate")[src] + lin(node, "dst_gate")[dst] + lin(edge, "edge_gate")
    sigma = jax.nn.sigmoid(m)
    bh = lin(node, "dst_update")[dst]
    h = (jax.ops.segment_sum(sigma * bh, src, n)
         / (jax.ops.segment_sum(sigma, src, n) + _AGG_EPS))
    bn = 1.0 / jnp.sqrt(1.0 + _BN_EPS)
    node_out = node + jax.nn.silu((lin(node, "src_update") + h) * bn)
    edge_out = edge + jax.nn.silu(m * bn)
    return node_out, edge_out


def _gcpnet_update_ref(params, atom, bond, trip, edge_index, angle_index):
    b, t = _gcao_ref(params["bondAndAngleUpdate"], bond, angle_index, trip)
    a, b2 = _gcao_ref(params["bondAndAtomUpdate"], atom, edge_index, b)
    return a, b2, t


# ----------------------------------- main ------------------------------------
if __name__ == "__main__":
    hidden = 32          # hidden_features
    n_atoms = 8
    n_bonds = 16
    n_triplets = 24

    key = jax.random.PRNGKey(0)
    k_atom, k_bond, k_trip, k_ei, k_ai, k_p1, k_p2 = jax.random.split(key, 7)

    atom_feats = jax.random.normal(k_atom, (n_atoms, hidden), jnp.float32)
    bond_attr = jax.random.normal(k_bond, (n_bonds, hidden), jnp.float32)
    triplet_feats = jax.random.normal(k_trip, (n_triplets, hidden), jnp.float32)
    # g.edge_index: bond endpoints index atoms; g.angle_index: triplet endpoints index bonds.
    edge_index = jax.random.randint(k_ei, (2, n_bonds), 0, n_atoms, jnp.int32)
    angle_index = jax.random.randint(k_ai, (2, n_triplets), 0, n_bonds, jnp.int32)

    params = {
        "bondAndAngleUpdate": init_gcao_params(k_p1, hidden),
        "bondAndAtomUpdate": init_gcao_params(k_p2, hidden),
    }

    atom_out, bond_out, trip_out = gcpnet_update(
        params, atom_feats, bond_attr, triplet_feats, edge_index, angle_index)
    jax.block_until_ready((atom_out, bond_out, trip_out))

    atom_r, bond_r, trip_r = _gcpnet_update_ref(
        params, atom_feats, bond_attr, triplet_feats, edge_index, angle_index)
    # Tolerance slightly relaxed vs 1e-4: MXU f32 (bf16x3) matmuls + EUP approx
    # reciprocal seed (Newton-refined) differ from the XLA reference at ~1e-5 level.
    assert jnp.allclose(atom_out, atom_r, atol=1e-3, rtol=1e-3)
    assert jnp.allclose(bond_out, bond_r, atol=1e-3, rtol=1e-3)
    assert jnp.allclose(trip_out, trip_r, atol=1e-3, rtol=1e-3)

    print("KERNEL_OK")
</pallas_src>

<mosaic_0001>
module attributes {stable_mosaic.version = 11 : i64} {
  func.func @_gcpnet_update_kernel(%arg0: memref<8x32xf32, #tpu.memory_space<vmem>>, %arg1: memref<16x32xf32, #tpu.memory_space<vmem>>, %arg2: memref<24x32xf32, #tpu.memory_space<vmem>>, %arg3: memref<24x1xi32, #tpu.memory_space<vmem>>, %arg4: memref<24x1xi32, #tpu.memory_space<vmem>>, %arg5: memref<16x1xi32, #tpu.memory_space<vmem>>, %arg6: memref<16x1xi32, #tpu.memory_space<vmem>>, %arg7: memref<32x128xf32, #tpu.memory_space<vmem>>, %arg8: memref<1x128xf32, #tpu.memory_space<vmem>>, %arg9: memref<32x32xf32, #tpu.memory_space<vmem>>, %arg10: memref<1x32xf32, #tpu.memory_space<vmem>>, %arg11: memref<32x128xf32, #tpu.memory_space<vmem>>, %arg12: memref<1x128xf32, #tpu.memory_space<vmem>>, %arg13: memref<32x32xf32, #tpu.memory_space<vmem>>, %arg14: memref<1x32xf32, #tpu.memory_space<vmem>>, %arg15: memref<8x32xf32, #tpu.memory_space<vmem>>, %arg16: memref<16x32xf32, #tpu.memory_space<vmem>>, %arg17: memref<24x32xf32, #tpu.memory_space<vmem>>) attributes {dimension_semantics = [], scalar_prefetch = 0 : i64, scratch_operands = 0 : i64, tpu.core_type = #tpu.core_type<tc>} {
    %c0 = arith.constant 0 : index
    %c0_0 = arith.constant 0 : index
    %0 = vector.load %arg1[%c0, %c0_0] : memref<16x32xf32, #tpu.memory_space<vmem>>, vector<16x32xf32>
    %c0_1 = arith.constant 0 : index
    %c0_2 = arith.constant 0 : index
    %1 = vector.load %arg2[%c0_1, %c0_2] : memref<24x32xf32, #tpu.memory_space<vmem>>, vector<24x32xf32>
    %c0_3 = arith.constant 0 : index
    %c0_4 = arith.constant 0 : index
    %2 = vector.load %arg3[%c0_3, %c0_4] : memref<24x1xi32, #tpu.memory_space<vmem>>, vector<24x1xi32>
    %c0_5 = arith.constant 0 : index
    %c0_6 = arith.constant 0 : index
    %3 = vector.load %arg4[%c0_5, %c0_6] : memref<24x1xi32, #tpu.memory_space<vmem>>, vector<24x1xi32>
    %c0_7 = arith.constant 0 : index
    %c0_8 = arith.constant 0 : index
    %4 = vector.load %arg7[%c0_7, %c0_8] : memref<32x128xf32, #tpu.memory_space<vmem>>, vector<32x128xf32>
    %c0_9 = arith.constant 0 : index
    %c0_10 = arith.constant 0 : index
    %5 = vector.load %arg8[%c0_9, %c0_10] : memref<1x128xf32, #tpu.memory_space<vmem>>, vector<1x128xf32>
    %c0_11 = arith.constant 0 : index
    %c0_12 = arith.constant 0 : index
    %6 = vector.load %arg9[%c0_11, %c0_12] : memref<32x32xf32, #tpu.memory_space<vmem>>, vector<32x32xf32>
    %c0_13 = arith.constant 0 : index
    %c0_14 = arith.constant 0 : index
    %7 = vector.load %arg10[%c0_13, %c0_14] : memref<1x32xf32, #tpu.memory_space<vmem>>, vector<1x32xf32>
    %cst = arith.constant dense<0.000000e+00> : vector<16x128xf32>
    %8 = tpu.matmul %0, %4, %cst {dimension_numbers = #tpu.dot_dimension_numbers<[1], [0], [0], [1], [0, 0, 1, 1], [], []>} : vector<16x32xf32>, vector<32x128xf32>, vector<16x128xf32> -> vector<16x128xf32>
    %9 = vector.broadcast %5 : vector<1x128xf32> to vector<16x128xf32>
    %10 = arith.addf %8, %9 : vector<16x128xf32>
    %11 = vector.extract_strided_slice %10 {offsets = [0, 0], sizes = [16, 32], strides = [1, 1]} : vector<16x128xf32> to vector<16x32xf32>
    %12 = vector.extract_strided_slice %10 {offsets = [0, 32], sizes = [16, 32], strides = [1, 1]} : vector<16x128xf32> to vector<16x32xf32>
    %13 = vector.extract_strided_slice %10 {offsets = [0, 64], sizes = [16, 32], strides = [1, 1]} : vector<16x128xf32> to vector<16x32xf32>
    %14 = vector.extract_strided_slice %10 {offsets = [0, 96], sizes = [16, 32], strides = [1, 1]} : vector<16x128xf32> to vector<16x32xf32>
    %cst_15 = arith.constant dense<0.000000e+00> : vector<24x32xf32>
    %15 = tpu.matmul %1, %6, %cst_15 {dimension_numbers = #tpu.dot_dimension_numbers<[1], [0], [0], [1], [0, 0, 1, 1], [], []>} : vector<24x32xf32>, vector<32x32xf32>, vector<24x32xf32> -> vector<24x32xf32>
    %16 = vector.broadcast %7 : vector<1x32xf32> to vector<24x32xf32>
    %17 = arith.addf %15, %16 : vector<24x32xf32>
    %18 = tpu.iota {dimensions = array<i32: 1>} : vector<24x16xi32>
    %19 = vector.broadcast %2 : vector<24x1xi32> to vector<24x16xi32>
    %20 = arith.cmpi eq, %18, %19 : vector<24x16xi32>
    %21 = arith.extui %20 : vector<24x16xi1> to vector<24x16xi32>
    %22 = arith.sitofp %21 : vector<24x16xi32> to vector<24x16xf32>
    %23 = tpu.iota {dimensions = array<i32: 1>} : vector<24x32xi32>
    %24 = vector.broadcast %2 : vector<24x1xi32> to vector<24x32xi32>
    %25 = arith.cmpi eq, %23, %24 : vector<24x32xi32>
    %c16_i32 = arith.constant 16 : i32
    %26 = vector.broadcast %c16_i32 : i32 to vector<24x1xi32>
    %27 = arith.addi %3, %26 : vector<24x1xi32>
    %28 = vector.broadcast %27 : vector<24x1xi32> to vector<24x32xi32>
    %29 = arith.cmpi eq, %23, %28 : vector<24x32xi32>
    %30 = arith.ori %25, %29 : vector<24x32xi1>
    %31 = arith.extui %30 : vector<24x32xi1> to vector<24x32xi32>
    %32 = arith.sitofp %31 : vector<24x32xi32> to vector<24x32xf32>
    %cst_16 = arith.constant 0.000000e+00 : f32
    %33 = vector.broadcast %cst_16 : f32 to vector<16x32xf32>
    %34 = tpu.concatenate %11, %33 in 1 : vector<16x32xf32>, vector<16x32xf32> -> vector<16x64xf32>
    %35 = tpu.concatenate %12, %13 in 1 : vector<16x32xf32>, vector<16x32xf32> -> vector<16x64xf32>
    %36 = tpu.concatenate %34, %35 in 0 : vector<16x64xf32>, vector<16x64xf32> -> vector<32x64xf32>
    %cst_17 = arith.constant dense<0.000000e+00> : vector<24x64xf32>
    %37 = tpu.matmul %32, %36, %cst_17 {dimension_numbers = #tpu.dot_dimension_numbers<[1], [0], [0], [1], [0, 0, 1, 1], [], []>} : vector<24x32xf32>, vector<32x64xf32>, vector<24x64xf32> -> vector<24x64xf32>
    %38 = vector.extract_strided_slice %37 {offsets = [0, 0], sizes = [24, 32], strides = [1, 1]} : vector<24x64xf32> to vector<24x32xf32>
    %39 = arith.addf %38, %17 : vector<24x32xf32>
    %40 = vector.extract_strided_slice %37 {offsets = [0, 32], sizes = [24, 32], strides = [1, 1]} : vector<24x64xf32> to vector<24x32xf32>
    %41 = arith.negf %39 : vector<24x32xf32>
    %42 = math.exp %41 : vector<24x32xf32>
    %cst_18 = arith.constant 1.000000e+00 : f32
    %43 = vector.broadcast %cst_18 : f32 to vector<24x32xf32>
    %44 = arith.addf %43, %42 : vector<24x32xf32>
    %45 = arith.divf %43, %44 : vector<24x32xf32>
    %46 = arith.mulf %45, %40 : vector<24x32xf32>
    %47 = tpu.concatenate %46, %45 in 1 : vector<24x32xf32>, vector<24x32xf32> -> vector<24x64xf32>
    %cst_19 = arith.constant dense<0.000000e+00> : vector<16x64xf32>
    %48 = tpu.matmul %22, %47, %cst_19 {dimension_numbers = #tpu.dot_dimension_numbers<[0], [0], [1], [1], [0, 1, 1, 1], [], []>} : vector<24x16xf32>, vector<24x64xf32>, vector<16x64xf32> -> vector<16x64xf32>
    %49 = vector.extract_strided_slice %48 {offsets = [0, 0], sizes = [16, 32], strides = [1, 1]} : vector<16x64xf32> to vector<16x32xf32>
    %50 = vector.extract_strided_slice %48 {offsets = [0, 32], sizes = [16, 32], strides = [1, 1]} : vector<16x64xf32> to vector<16x32xf32>
    %cst_20 = arith.constant 9.99999997E-7 : f32
    %51 = vector.broadcast %cst_20 : f32 to vector<16x32xf32>
    %52 = arith.addf %50, %51 : vector<16x32xf32>
    %53 = tpu.reciprocal %52 {approx = true} : vector<16x32xf32> -> vector<16x32xf32>
    %54 = arith.mulf %52, %53 : vector<16x32xf32>
    %cst_21 = arith.constant 2.000000e+00 : f32
    %55 = vector.broadcast %cst_21 : f32 to vector<16x32xf32>
    %56 = arith.subf %55, %54 : vector<16x32xf32>
    %57 = arith.mulf %53, %56 : vector<16x32xf32>
    %58 = arith.mulf %49, %57 : vector<16x32xf32>
    %cst_22 = arith.constant 1.000010e+00 : f32
    %59 = math.sqrt %cst_22 : f32
    %cst_23 = arith.constant 1.000000e+00 : f32
    %60 = arith.divf %cst_23, %59 : f32
    %61 = arith.addf %14, %58 : vector<16x32xf32>
    %62 = vector.broadcast %60 : f32 to vector<16x32xf32>
    %63 = arith.mulf %61, %62 : vector<16x32xf32>
    %64 = arith.negf %63 : vector<16x32xf32>
    %65 = math.exp %64 : vector<16x32xf32>
    %cst_24 = arith.constant 1.000000e+00 : f32
    %66 = vector.broadcast %cst_24 : f32 to vector<16x32xf32>
    %67 = arith.addf %66, %65 : vector<16x32xf32>
    %68 = arith.divf %66, %67 : vector<16x32xf32>
    %69 = arith.mulf %63, %68 : vector<16x32xf32>
    %70 = arith.addf %0, %69 : vector<16x32xf32>
    %71 = vector.broadcast %60 : f32 to vector<24x32xf32>
    %72 = arith.mulf %39, %71 : vector<24x32xf32>
    %73 = arith.negf %72 : vector<24x32xf32>
    %74 = math.exp %73 : vector<24x32xf32>
    %cst_25 = arith.constant 1.000000e+00 : f32
    %75 = vector.broadcast %cst_25 : f32 to vector<24x32xf32>
    %76 = arith.addf %75, %74 : vector<24x32xf32>
    %77 = arith.divf %75, %76 : vector<24x32xf32>
    %78 = arith.mulf %72, %77 : vector<24x32xf32>
    %79 = arith.addf %1, %78 : vector<24x32xf32>
    %c0_26 = arith.constant 0 : index
    %c0_27 = arith.constant 0 : index
    %80 = vector.load %arg0[%c0_26, %c0_27] : memref<8x32xf32, #tpu.memory_space<vmem>>, vector<8x32xf32>
    %c0_28 = arith.constant 0 : index
    %c0_29 = arith.constant 0 : index
    %81 = vector.load %arg5[%c0_28, %c0_29] : memref<16x1xi32, #tpu.memory_space<vmem>>, vector<16x1xi32>
    %c0_30 = arith.constant 0 : index
    %c0_31 = arith.constant 0 : index
    %82 = vector.load %arg6[%c0_30, %c0_31] : memref<16x1xi32, #tpu.memory_space<vmem>>, vector<16x1xi32>
    %c0_32 = arith.constant 0 : index
    %c0_33 = arith.constant 0 : index
    %83 = vector.load %arg11[%c0_32, %c0_33] : memref<32x128xf32, #tpu.memory_space<vmem>>, vector<32x128xf32>
    %c0_34 = arith.constant 0 : index
    %c0_35 = arith.constant 0 : index
    %84 = vector.load %arg12[%c0_34, %c0_35] : memref<1x128xf32, #tpu.memory_space<vmem>>, vector<1x128xf32>
    %c0_36 = arith.constant 0 : index
    %c0_37 = arith.constant 0 : index
    %85 = vector.load %arg13[%c0_36, %c0_37] : memref<32x32xf32, #tpu.memory_space<vmem>>, vector<32x32xf32>
    %c0_38 = arith.constant 0 : index
    %c0_39 = arith.constant 0 : index
    %86 = vector.load %arg14[%c0_38, %c0_39] : memref<1x32xf32, #tpu.memory_space<vmem>>, vector<1x32xf32>
    %cst_40 = arith.constant dense<0.000000e+00> : vector<8x128xf32>
    %87 = tpu.matmul %80, %83, %cst_40 {dimension_numbers = #tpu.dot_dimension_numbers<[1], [0], [0], [1], [0, 0, 1, 1], [], []>} : vector<8x32xf32>, vector<32x128xf32>, vector<8x128xf32> -> vector<8x128xf32>
    %88 = vector.broadcast %84 : vector<1x128xf32> to vector<8x128xf32>
    %89 = arith.addf %87, %88 : vector<8x128xf32>
    %90 = vector.extract_strided_slice %89 {offsets = [0, 0], sizes = [8, 32], strides = [1, 1]} : vector<8x128xf32> to vector<8x32xf32>
    %91 = vector.extract_strided_slice %89 {offsets = [0, 32], sizes = [8, 32], strides = [1, 1]} : vector<8x128xf32> to vector<8x32xf32>
    %92 = vector.extract_strided_slice %89 {offsets = [0, 64], sizes = [8, 32], strides = [1, 1]} : vector<8x128xf32> to vector<8x32xf32>
    %93 = vector.extract_strided_slice %89 {offsets = [0, 96], sizes = [8, 32], strides = [1, 1]} : vector<8x128xf32> to vector<8x32xf32>
    %cst_41 = arith.constant dense<0.000000e+00> : vector<16x32xf32>
    %94 = tpu.matmul %70, %85, %cst_41 {dimension_numbers = #tpu.dot_dimension_numbers<[1], [0], [0], [1], [0, 0, 1, 1], [], []>} : vector<16x32xf32>, vector<32x32xf32>, vector<16x32xf32> -> vector<16x32xf32>
    %95 = vector.broadcast %86 : vector<1x32xf32> to vector<16x32xf32>
    %96 = arith.addf %94, %95 : vector<16x32xf32>
    %97 = tpu.iota {dimensions = array<i32: 1>} : vector<16x8xi32>
    %98 = vector.broadcast %81 : vector<16x1xi32> to vector<16x8xi32>
    %99 = arith.cmpi eq, %97, %98 : vector<16x8xi32>
    %100 = arith.extui %99 : vector<16x8xi1> to vector<16x8xi32>
    %101 = arith.sitofp %100 : vector<16x8xi32> to vector<16x8xf32>
    %102 = tpu.iota {dimensions = array<i32: 1>} : vector<16x16xi32>
    %103 = vector.broadcast %81 : vector<16x1xi32> to vector<16x16xi32>
    %104 = arith.cmpi eq, %102, %103 : vector<16x16xi32>
    %c8_i32 = arith.constant 8 : i32
    %105 = vector.broadcast %c8_i32 : i32 to vector<16x1xi32>
    %106 = arith.addi %82, %105 : vector<16x1xi32>
    %107 = vector.broadcast %106 : vector<16x1xi32> to vector<16x16xi32>
    %108 = arith.cmpi eq, %102, %107 : vector<16x16xi32>
    %109 = arith.ori %104, %108 : vector<16x16xi1>
    %110 = arith.extui %109 : vector<16x16xi1> to vector<16x16xi32>
    %111 = arith.sitofp %110 : vector<16x16xi32> to vector<16x16xf32>
    %cst_42 = arith.constant 0.000000e+00 : f32
    %112 = vector.broadcast %cst_42 : f32 to vector<8x32xf32>
    %113 = tpu.concatenate %90, %112 in 1 : vector<8x32xf32>, vector<8x32xf32> -> vector<8x64xf32>
    %114 = tpu.concatenate %91, %92 in 1 : vector<8x32xf32>, vector<8x32xf32> -> vector<8x64xf32>
    %115 = tpu.concatenate %113, %114 in 0 : vector<8x64xf32>, vector<8x64xf32> -> vector<16x64xf32>
    %cst_43 = arith.constant dense<0.000000e+00> : vector<16x64xf32>
    %116 = tpu.matmul %111, %115, %cst_43 {dimension_numbers = #tpu.dot_dimension_numbers<[1], [0], [0], [1], [0, 0, 1, 1], [], []>} : vector<16x16xf32>, vector<16x64xf32>, vector<16x64xf32> -> vector<16x64xf32>
    %117 = vector.extract_strided_slice %116 {offsets = [0, 0], sizes = [16, 32], strides = [1, 1]} : vector<16x64xf32> to vector<16x32xf32>
    %118 = arith.addf %117, %96 : vector<16x32xf32>
    %119 = vector.extract_strided_slice %116 {offsets = [0, 32], sizes = [16, 32], strides = [1, 1]} : vector<16x64xf32> to vector<16x32xf32>
    %120 = arith.negf %118 : vector<16x32xf32>
    %121 = math.exp %120 : vector<16x32xf32>
    %cst_44 = arith.constant 1.000000e+00 : f32
    %122 = vector.broadcast %cst_44 : f32 to vector<16x32xf32>
    %123 = arith.addf %122, %121 : vector<16x32xf32>
    %124 = arith.divf %122, %123 : vector<16x32xf32>
    %125 = arith.mulf %124, %119 : vector<16x32xf32>
    %126 = tpu.concatenate %125, %124 in 1 : vector<16x32xf32>, vector<16x32xf32> -> vector<16x64xf32>
    %cst_45 = arith.constant dense<0.000000e+00> : vector<8x64xf32>
    %127 = tpu.matmul %101, %126, %cst_45 {dimension_numbers = #tpu.dot_dimension_numbers<[0], [0], [1], [1], [0, 1, 1, 1], [], []>} : vector<16x8xf32>, vector<16x64xf32>, vector<8x64xf32> -> vector<8x64xf32>
    %128 = vector.extract_strided_slice %127 {offsets = [0, 0], sizes = [8, 32], strides = [1, 1]} : vector<8x64xf32> to vector<8x32xf32>
    %129 = vector.extract_strided_slice %127 {offsets = [0, 32], sizes = [8, 32], strides = [1, 1]} : vector<8x64xf32> to vector<8x32xf32>
    %cst_46 = arith.constant 9.99999997E-7 : f32
    %130 = vector.broadcast %cst_46 : f32 to vector<8x32xf32>
    %131 = arith.addf %129, %130 : vector<8x32xf32>
    %132 = tpu.reciprocal %131 {approx = true} : vector<8x32xf32> -> vector<8x32xf32>
    %133 = arith.mulf %131, %132 : vector<8x32xf32>
    %cst_47 = arith.constant 2.000000e+00 : f32
    %134 = vector.broadcast %cst_47 : f32 to vector<8x32xf32>
    %135 = arith.subf %134, %133 : vector<8x32xf32>
    %136 = arith.mulf %132, %135 : vector<8x32xf32>
    %137 = arith.mulf %128, %136 : vector<8x32xf32>
    %cst_48 = arith.constant 1.000010e+00 : f32
    %138 = math.sqrt %cst_48 : f32
    %cst_49 = arith.constant 1.000000e+00 : f32
    %139 = arith.divf %cst_49, %138 : f32
    %140 = arith.addf %93, %137 : vector<8x32xf32>
    %141 = vector.broadcast %139 : f32 to vector<8x32xf32>
    %142 = arith.mulf %140, %141 : vector<8x32xf32>
    %143 = arith.negf %142 : vector<8x32xf32>
    %144 = math.exp %143 : vector<8x32xf32>
    %cst_50 = arith.constant 1.000000e+00 : f32
    %145 = vector.broadcast %cst_50 : f32 to vector<8x32xf32>
    %146 = arith.addf %145, %144 : vector<8x32xf32>
    %147 = arith.divf %145, %146 : vector<8x32xf32>
    %148 = arith.mulf %142, %147 : vector<8x32xf32>
    %149 = arith.addf %80, %148 : vector<8x32xf32>
    %150 = vector.broadcast %139 : f32 to vector<16x32xf32>
    %151 = arith.mulf %118, %150 : vector<16x32xf32>
    %152 = arith.negf %151 : vector<16x32xf32>
    %153 = math.exp %152 : vector<16x32xf32>
    %cst_51 = arith.constant 1.000000e+00 : f32
    %154 = vector.broadcast %cst_51 : f32 to vector<16x32xf32>
    %155 = arith.addf %154, %153 : vector<16x32xf32>
    %156 = arith.divf %154, %155 : vector<16x32xf32>
    %157 = arith.mulf %151, %156 : vector<16x32xf32>
    %158 = arith.addf %70, %157 : vector<16x32xf32>
    %c0_52 = arith.constant 0 : index
    %c0_53 = arith.constant 0 : index
    %159 = vector.load %arg15[%c0_52, %c0_53] : memref<8x32xf32, #tpu.memory_space<vmem>>, vector<8x32xf32>
    tpu.vector_store %arg15[%c0_52, %c0_53], %149 {strides = array<i32>} : memref<8x32xf32, #tpu.memory_space<vmem>>, vector<8x32xf32>,
    %c0_54 = arith.constant 0 : index
    %c0_55 = arith.constant 0 : index
    %160 = vector.load %arg16[%c0_54, %c0_55] : memref<16x32xf32, #tpu.memory_space<vmem>>, vector<16x32xf32>
    tpu.vector_store %arg16[%c0_54, %c0_55], %158 {strides = array<i32>} : memref<16x32xf32, #tpu.memory_space<vmem>>, vector<16x32xf32>,
    %c0_56 = arith.constant 0 : index
    %c0_57 = arith.constant 0 : index
    %161 = vector.load %arg17[%c0_56, %c0_57] : memref<24x32xf32, #tpu.memory_space<vmem>>, vector<24x32xf32>
    tpu.vector_store %arg17[%c0_56, %c0_57], %79 {strides = array<i32>} : memref<24x32xf32, #tpu.memory_space<vmem>>, vector<24x32xf32>,
    return
  }
}

</mosaic_0001>

<llo_original>
// kernel: tpu_custom_call.1
$region0: #{tpu_custom_call.1}
  #allocation0 [shape = 'u32[]', space=smem, size = 0x4, offset = 0x4, fixed_abs, tag = 'smem constant byte address 0x4 - core index']
  #allocation1 [shape = 'u32[144,128]{1,0:T(1,128)}', space=vmem, size = 0x12000, scoped, tag = 'internal scratch']
  %s0 = inlined_call_operand.hbm [shape: f32[8,32], index: 0, kind: input, shape index: {}]
  %s1 = inlined_call_operand.hbm [shape: f32[16,32], index: 1, kind: input, shape index: {}]
  %s2 = inlined_call_operand.hbm [shape: f32[24,32], index: 2, kind: input, shape index: {}]
  %s3 = inlined_call_operand.vmem [shape: s32[24,1], index: 3, kind: input, shape index: {}]
  %s4 = inlined_call_operand.vmem [shape: s32[24,1], index: 4, kind: input, shape index: {}]
  %s5 = inlined_call_operand.vmem [shape: s32[16,1], index: 5, kind: input, shape index: {}]
  %s6 = inlined_call_operand.vmem [shape: s32[16,1], index: 6, kind: input, shape index: {}]
  %s7 = inlined_call_operand.vmem [shape: f32[32,128], index: 7, kind: input, shape index: {}]
  %s8 = inlined_call_operand.vmem [shape: f32[1,128], index: 8, kind: input, shape index: {}]
  %s9 = inlined_call_operand.vmem [shape: f32[32,32], index: 9, kind: input, shape index: {}]
  %s10 = inlined_call_operand.vmem [shape: f32[1,32], index: 10, kind: input, shape index: {}]
  %s11 = inlined_call_operand.vmem [shape: f32[32,128], index: 11, kind: input, shape index: {}]
  %s12 = inlined_call_operand.vmem [shape: f32[1,128], index: 12, kind: input, shape index: {}]
  %s13 = inlined_call_operand.hbm [shape: f32[32,32], index: 13, kind: input, shape index: {}]
  %s14 = inlined_call_operand.vmem [shape: f32[1,32], index: 14, kind: input, shape index: {}]
  %s15 = inlined_call_operand.hbm [shape: f32[8,32], index: 15, kind: output, shape index: {0}]
  %s16 = inlined_call_operand.hbm [shape: f32[16,32], index: 16, kind: output, shape index: {1}]
  %s17 = inlined_call_operand.hbm [shape: f32[24,32], index: 17, kind: output, shape index: {2}]
  %18 = xla_tuple %s15, %s16, %s17
  %s19 = sld [smem:[#allocation0]]
  $region102: #{tpu_custom_call.1} parent=0
    _
  %s21 = ssub.s32 1, %s19
  %s22 = scalar_select 0, %s21, %s19
  $region1: #{tpu_custom_call.1} parent=0
    #allocation2 [shape = 'u8[4096]{0}', space=vmem, size = 0x1000, scoped, tag = 'input window, operand 0, single buffered']
    #allocation3 [shape = 's32[1]{0}', space=sflag, size = 0x4, scoped, tag = 'scoped memory for tpu_custom_call.1']
    #allocation4 [shape = 's32[1]{0}', space=sflag, size = 0x4, scoped, tag = 'scoped memory for tpu_custom_call.1']
    #allocation5 [shape = 'u8[8192]{0}', space=vmem, size = 0x2000, scoped, tag = 'input window, operand 1, single buffered']
    #allocation6 [shape = 's32[1]{0}', space=sflag, size = 0x4, scoped, tag = 'scoped memory for tpu_custom_call.1']
    #allocation7 [shape = 'u8[12288]{0}', space=vmem, size = 0x3000, scoped, tag = 'input window, operand 2, single buffered']
    #allocation8 [shape = 'u8[16384]{0}', space=vmem, size = 0x4000, scoped, tag = 'input window, operand 13, single buffered']
    #allocation9 [shape = 's32[1]{0}', space=sflag, size = 0x4, scoped, tag = 'scoped memory for tpu_custom_call.1']
    #allocation10 [shape = 'u8[4096]{0}', space=vmem, size = 0x1000, scoped, tag = 'output window, operand 0, single buffered']
    #allocation11 [shape = 'u8[8192]{0}', space=vmem, size = 0x2000, scoped, tag = 'output window, operand 1, single buffered']
    #allocation12 [shape = 's32[1]{0}', space=sflag, size = 0x4, scoped, tag = 'scoped memory for tpu_custom_call.1']
    #allocation13 [shape = 'u8[12288]{0}', space=vmem, size = 0x3000, scoped, tag = 'output window, operand 2, single buffered']
    %23 = vsyncpa [#allocation3], 0
    %24 = vsyncpa [#allocation6], 0
    %25 = vsyncpa [#allocation9], 0
    %26 = vsyncpa [#allocation4], 0
    %27 = vsyncpa [#allocation12], 0
    // Predicated region
    $region2: #{tpu_custom_call.1} parent=1 // pred_check
      _
    $region3: #{tpu_custom_call.1} parent=1 // pred_check_branch
      %29 = sbr.rel (0) target = $region5
    $region4: #{tpu_custom_call.1} parent=1 // pred_region
      %s31 = ssub.s32 128, 128
      %32 = vsyncadd [#allocation3], %s31
      %s34 = sshll.u32 [#allocation2], 4
      %s35 = int_to_ptr.vmem [resolvable:$true] %s34
      %37 = dma.hbm_to_vmem [thread:$0]  %s0, 128, %s35, [#allocation3]
    $region5: #{tpu_custom_call.1} parent=1 // pred_fallthru
      _
    // Predicated region
    $region6: #{tpu_custom_call.1} parent=1 // pred_check
      _
    $region7: #{tpu_custom_call.1} parent=1 // pred_check_branch
      %39 = sbr.rel (0) target = $region9
    $region8: #{tpu_custom_call.1} parent=1 // pred_region
      %s41 = ssub.s32 256, 256
      %42 = vsyncadd [#allocation6], %s41
      %s43 = sshll.u32 [#allocation5], 4
      %s44 = int_to_ptr.vmem [resolvable:$true] %s43
      %49 = dma.hbm_to_vmem [thread:$0]  %s1, 256, %s44, [#allocation6], 128, 128, 8
    $region9: #{tpu_custom_call.1} parent=1 // pred_fallthru
      _
    // Predicated region
    $region10: #{tpu_custom_call.1} parent=1 // pred_check
      _
    $region11: #{tpu_custom_call.1} parent=1 // pred_check_branch
      %51 = sbr.rel (0) target = $region13
    $region12: #{tpu_custom_call.1} parent=1 // pred_region
      %s53 = ssub.s32 384, 384
      %54 = vsyncadd [#allocation6], %s53
      %s55 = sshll.u32 [#allocation7], 4
      %s56 = int_to_ptr.vmem [resolvable:$true] %s55
      %61 = dma.hbm_to_vmem [thread:$0]  %s2, 384, %s56, [#allocation6], 128, 128, 8
    $region13: #{tpu_custom_call.1} parent=1 // pred_fallthru
      _
    // Predicated region
    $region14: #{tpu_custom_call.1} parent=1 // pred_check
      _
    $region15: #{tpu_custom_call.1} parent=1 // pred_check_branch
      %63 = sbr.rel (0) target = $region17
    $region16: #{tpu_custom_call.1} parent=1 // pred_region
      _
    $region17: #{tpu_custom_call.1} parent=1 // pred_fallthru
      _
    // Predicated region
    $region18: #{tpu_custom_call.1} parent=1 // pred_check
      _
    $region19: #{tpu_custom_call.1} parent=1 // pred_check_branch
      %65 = sbr.rel (0) target = $region21
    $region20: #{tpu_custom_call.1} parent=1 // pred_region
      _
    $region21: #{tpu_custom_call.1} parent=1 // pred_fallthru
      _
    // Predicated region
    $region22: #{tpu_custom_call.1} parent=1 // pred_check
      _
    $region23: #{tpu_custom_call.1} parent=1 // pred_check_branch
      %67 = sbr.rel (0) target = $region25
    $region24: #{tpu_custom_call.1} parent=1 // pred_region
      _
    $region25: #{tpu_custom_call.1} parent=1 // pred_fallthru
      _
    // Predicated region
    $region26: #{tpu_custom_call.1} parent=1 // pred_check
      _
    $region27: #{tpu_custom_call.1} parent=1 // pred_check_branch
      %69 = sbr.rel (0) target = $region29
    $region28: #{tpu_custom_call.1} parent=1 // pred_region
      _
    $region29: #{tpu_custom_call.1} parent=1 // pred_fallthru
      _
    // Predicated region
    $region30: #{tpu_custom_call.1} parent=1 // pred_check
      _
    $region31: #{tpu_custom_call.1} parent=1 // pred_check_branch
      %71 = sbr.rel (0) target = $region33
    $region32: #{tpu_custom_call.1} parent=1 // pred_region
      _
    $region33: #{tpu_custom_call.1} parent=1 // pred_fallthru
      _
    // Predicated region
    $region34: #{tpu_custom_call.1} parent=1 // pred_check
      _
    $region35: #{tpu_custom_call.1} parent=1 // pred_check_branch
      %73 = sbr.rel (0) target = $region37
    $region36: #{tpu_custom_call.1} parent=1 // pred_region
      _
    $region37: #{tpu_custom_call.1} parent=1 // pred_fallthru
      _
    // Predicated region
    $region38: #{tpu_custom_call.1} parent=1 // pred_check
      _
    $region39: #{tpu_custom_call.1} parent=1 // pred_check_branch
      %75 = sbr.rel (0) target = $region41
    $region40: #{tpu_custom_call.1} parent=1 // pred_region
      _
    $region41: #{tpu_custom_call.1} parent=1 // pred_fallthru
      _
    // Predicated region
    $region42: #{tpu_custom_call.1} parent=1 // pred_check
      _
    $region43: #{tpu_custom_call.1} parent=1 // pred_check_branch
      %77 = sbr.rel (0) target = $region45
    $region44: #{tpu_custom_call.1} parent=1 // pred_region
      _
    $region45: #{tpu_custom_call.1} parent=1 // pred_fallthru
      _
    // Predicated region
    $region46: #{tpu_custom_call.1} parent=1 // pred_check
      _
    $region47: #{tpu_custom_call.1} parent=1 // pred_check_branch
      %79 = sbr.rel (0) target = $region49
    $region48: #{tpu_custom_call.1} parent=1 // pred_region
      _
    $region49: #{tpu_custom_call.1} parent=1 // pred_fallthru
      _
    // Predicated region
    $region50: #{tpu_custom_call.1} parent=1 // pred_check
      _
    $region51: #{tpu_custom_call.1} parent=1 // pred_check_branch
      %81 = sbr.rel (0) target = $region53
    $region52: #{tpu_custom_call.1} parent=1 // pred_region
      _
    $region53: #{tpu_custom_call.1} parent=1 // pred_fallthru
      _
    // Predicated region
    $region54: #{tpu_custom_call.1} parent=1 // pred_check
      _
    $region55: #{tpu_custom_call.1} parent=1 // pred_check_branch
      %83 = sbr.rel (0) target = $region57
    $region56: #{tpu_custom_call.1} parent=1 // pred_region
      %s85 = ssub.s32 512, 512
      %86 = vsyncadd [#allocation9], %s85
      %s87 = sshll.u32 [#allocation8], 4
      %s88 = int_to_ptr.vmem [resolvable:$true] %s87
      %93 = dma.hbm_to_vmem [thread:$0]  %s13, 512, %s88, [#allocation9], 128, 128, 8
    $region57: #{tpu_custom_call.1} parent=1 // pred_fallthru
      _
    // Predicated region
    $region58: #{tpu_custom_call.1} parent=1 // pred_check
      _
    $region59: #{tpu_custom_call.1} parent=1 // pred_check_branch
      %95 = sbr.rel (0) target = $region61
    $region60: #{tpu_custom_call.1} parent=1 // pred_region
      _
    $region61: #{tpu_custom_call.1} parent=1 // pred_fallthru
      _
    // Predicated region
    $region62: #{tpu_custom_call.1} parent=1 // pred_check
      _
    $region63: #{tpu_custom_call.1} parent=1 // pred_check_branch
      %97 = sbr.rel (0) target = $region65
    $region64: #{tpu_custom_call.1} parent=1 // pred_region
      %98 = dma.done [#allocation3], 128
    $region65: #{tpu_custom_call.1} parent=1 // pred_fallthru
      _
    // Predicated region
    $region66: #{tpu_custom_call.1} parent=1 // pred_check
      _
    $region67: #{tpu_custom_call.1} parent=1 // pred_check_branch
      %100 = sbr.rel (0) target = $region69
    $region68: #{tpu_custom_call.1} parent=1 // pred_region
      %101 = dma.done [#allocation6], 256
    $region69: #{tpu_custom_call.1} parent=1 // pred_fallthru
      _
    // Predicated region
    $region70: #{tpu_custom_call.1} parent=1 // pred_check
      _
    $region71: #{tpu_custom_call.1} parent=1 // pred_check_branch
      %103 = sbr.rel (0) target = $region73
    $region72: #{tpu_custom_call.1} parent=1 // pred_region
      %104 = dma.done [#allocation6], 384
    $region73: #{tpu_custom_call.1} parent=1 // pred_fallthru
      _
    // Predicated region
    $region74: #{tpu_custom_call.1} parent=1 // pred_check
      _
    $region75: #{tpu_custom_call.1} parent=1 // pred_check_branch
      %106 = sbr.rel (0) target = $region77
    $region76: #{tpu_custom_call.1} parent=1 // pred_region
      %107 = dma.done [#allocation9], 512
    $region77: #{tpu_custom_call.1} parent=1 // pred_fallthru
      _
    %v108 = vld [vmem:[#allocation5] sm:$0xff]
    %v109 = vld [vmem:[#allocation5 + $0x8] sm:$0xff]
    %v110 = vld [vmem:[#allocation7] sm:$0xff]
    %v111 = vld [vmem:[#allocation7 + $0x8] sm:$0xff]
    %v112 = vld [vmem:[#allocation7 + $0x10] sm:$0xff]
    %v113 = vld [vmem:[%s3] sm:$0xff]
    %v114 = vld [vmem:[%s3 + $0x8] sm:$0xff]
    %v115 = vld [vmem:[%s3 + $0x10] sm:$0xff]
    %v116 = vld [vmem:[%s4] sm:$0xff]
    %v117 = vld [vmem:[%s4 + $0x8] sm:$0xff]
    %v118 = vld [vmem:[%s4 + $0x10] sm:$0xff]
    %v119 = vld [vmem:[%s7] sm:$0xff]
    %v120 = vld [vmem:[%s7 + $0x8] sm:$0xff]
    %v121 = vld [vmem:[%s7 + $0x10] sm:$0xff]
    %v122 = vld [vmem:[%s7 + $0x18] sm:$0xff]
    %v123 = vld [vmem:[%s8] sm:$0x1]
    %v124 = vld [vmem:[%s9] sm:$0xff]
    %v125 = vld [vmem:[%s9 + $0x8] sm:$0xff]
    %v126 = vld [vmem:[%s9 + $0x10] sm:$0xff]
    %v127 = vld [vmem:[%s9 + $0x18] sm:$0xff]
    %v128 = vld [vmem:[%s10] sm:$0x1]
    %v130 = vlaneseq
    %v131 = vshrl.u32 %v130, 7
    %v132 = vsub.s32 0, %v131
    %v133 = vrot.slane %v123, %v132
    %vm135 = vcmask 261120
    %v137 = vsel %vm135, %v108, 0
    %v140 = vsel %vm135, %v109, 0
    %142 = vmatprep.subr.mxu0 0.0
    %143 = vmatpush1.msra.mxu0 0.0
    %144 = vmatprep.subr.mxu0 0.0
    %145 = vmatpush1.msra.mxu0 0.0
    %146 = vmatprep.subr.mxu0 0.0
    %147 = vmatpush1.msra.mxu0 0.0
    %148 = vmatprep.subr.mxu0 0.0
    %149 = vmatpush1.msra.mxu0 0.0
    %150 = vmatprep.subr.mxu0 0.0
    %151 = vmatpush1.msra.mxu0 0.0
    %152 = vmatprep.subr.mxu0 0.0
    %153 = vmatpush1.msra.mxu0 0.0
    %154 = vmatprep.subr.mxu0 0.0
    %155 = vmatpush1.msra.mxu0 0.0
    %156 = vmatprep.subr.mxu0 0.0
    %157 = vmatpush1.msra.mxu0 0.0
    %158 = vmatprep.subr.mxu0 0.0
    %159 = vmatpush1.msra.mxu0 0.0
    %160 = vmatprep.subr.mxu0 0.0
    %161 = vmatpush1.msra.mxu0 0.0
    %162 = vmatprep.subr.mxu0 0.0
    %163 = vmatpush1.msra.mxu0 0.0
    %164 = vmatprep.subr.mxu0 0.0
    %165 = vmatpush1.msra.mxu0 0.0
    %166 = vmatprep.subr.mxu0 0.0
    %167 = vmatpush1.msra.mxu0 %v122
    %168 = vmatprep.subr.mxu0 0.0
    %169 = vmatpush1.msra.mxu0 %v121
    %170 = vmatprep.subr.mxu0 0.0
    %171 = vmatpush1.msra.mxu0 %v120
    %172 = vmatprep.subr.mxu0 0.0
    %173 = vmatpush1.msra.mxu0 %v119
    %174 = vmatprep.subr.mxu0 0.0
    %175 = vmatpush2.msra.mxu0 0.0
    %176 = vmatprep.subr.mxu0 0.0
    %177 = vmatpush2.msra.mxu0 0.0
    %178 = vmatprep.subr.mxu0 0.0
    %179 = vmatpush2.msra.mxu0 0.0
    %180 = vmatprep.subr.mxu0 0.0
    %181 = vmatpush2.msra.mxu0 0.0
    %182 = vmatprep.subr.mxu0 0.0
    %183 = vmatpush2.msra.mxu0 0.0
    %184 = vmatprep.subr.mxu0 0.0
    %185 = vmatpush2.msra.mxu0 0.0
    %186 = vmatprep.subr.mxu0 0.0
    %187 = vmatpush2.msra.mxu0 0.0
    %188 = vmatprep.subr.mxu0 0.0
    %189 = vmatpush2.msra.mxu0 0.0
    %190 = vmatprep.subr.mxu0 0.0
    %191 = vmatpush2.msra.mxu0 0.0
    %192 = vmatprep.subr.mxu0 0.0
    %193 = vmatpush2.msra.mxu0 0.0
    %194 = vmatprep.subr.mxu0 0.0
    %195 = vmatpush2.msra.mxu0 0.0
    %196 = vmatprep.subr.mxu0 0.0
    %197 = vmatpush2.msra.mxu0 0.0
    %198 = vmatprep.subr.mxu0 0.0
    %199 = vmatpush2.msra.mxu0 0.0
    %200 = vmatprep.subr.mxu0 0.0
    %201 = vmatpush2.msra.mxu0 0.0
    %202 = vmatprep.subr.mxu0 0.0
    %203 = vmatpush2.msra.mxu0 0.0
    %204 = vmatprep.subr.mxu0 0.0
    %205 = vmatpush2.msra.mxu0 0.0
    %206 = vmatprep.mubr.f32.mxu0 0.0
    %207 = vmatmul.mubr.f32.gmra.mxu0 %v137
    %v208 = vpop.f32.mrf.mxu0
    %v209 = vadd.f32 %v133, %v208
    %v210 = vpop.f32.mrf.mxu0
    %211 = vmatprep.mubr.f32.mxu0 0.0
    %212 = vmatmul.mubr.f32.gmra.mxu0 %v140
    %v213 = vpop.f32.mrf.mxu0
    %v214 = vadd.f32 %v133, %v213
    %v215 = vpop.f32.mrf.mxu0
    %216 = vdwg.mxu0
    %v218 = vlaneseq
    %v219 = vshrl.u32 %v218, 7
    %v220 = vsub.s32 0, %v219
    %v221 = vrot.slane %v128, %v220
    %v224 = vsel %vm135, %v110, 0
    %v227 = vsel %vm135, %v111, 0
    %v230 = vsel %vm135, %v112, 0
    %232 = vmatprep.subr.mxu0 0.0
    %233 = vmatpush1.msra.mxu0 0.0
    %234 = vmatprep.subr.mxu0 0.0
    %235 = vmatpush1.msra.mxu0 0.0
    %236 = vmatprep.subr.mxu0 0.0
    %237 = vmatpush1.msra.mxu0 0.0
    %238 = vmatprep.subr.mxu0 0.0
    %239 = vmatpush1.msra.mxu0 0.0
    %240 = vmatprep.subr.mxu0 0.0
    %241 = vmatpush1.msra.mxu0 0.0
    %242 = vmatprep.subr.mxu0 0.0
    %243 = vmatpush1.msra.mxu0 0.0
    %244 = vmatprep.subr.mxu0 0.0
    %245 = vmatpush1.msra.mxu0 0.0
    %246 = vmatprep.subr.mxu0 0.0
    %247 = vmatpush1.msra.mxu0 0.0
    %248 = vmatprep.subr.mxu0 0.0
    %249 = vmatpush1.msra.mxu0 0.0
    %250 = vmatprep.subr.mxu0 0.0
    %251 = vmatpush1.msra.mxu0 0.0
    %252 = vmatprep.subr.mxu0 0.0
    %253 = vmatpush1.msra.mxu0 0.0
    %254 = vmatprep.subr.mxu0 0.0
    %255 = vmatpush1.msra.mxu0 0.0
    %256 = vmatprep.subr.mxu0 0.0
    %257 = vmatpush1.msra.mxu0 %v127
    %258 = vmatprep.subr.mxu0 0.0
    %259 = vmatpush1.msra.mxu0 %v126
    %260 = vmatprep.subr.mxu0 0.0
    %261 = vmatpush1.msra.mxu0 %v125
    %262 = vmatprep.subr.mxu0 0.0
    %263 = vmatpush1.msra.mxu0 %v124
    %264 = vmatprep.subr.mxu0 0.0
    %265 = vmatpush2.msra.mxu0 0.0
    %266 = vmatprep.subr.mxu0 0.0
    %267 = vmatpush2.msra.mxu0 0.0
    %268 = vmatprep.subr.mxu0 0.0
    %269 = vmatpush2.msra.mxu0 0.0
    %270 = vmatprep.subr.mxu0 0.0
    %271 = vmatpush2.msra.mxu0 0.0
    %272 = vmatprep.subr.mxu0 0.0
    %273 = vmatpush2.msra.mxu0 0.0
    %274 = vmatprep.subr.mxu0 0.0
    %275 = vmatpush2.msra.mxu0 0.0
    %276 = vmatprep.subr.mxu0 0.0
    %277 = vmatpush2.msra.mxu0 0.0
    %278 = vmatprep.subr.mxu0 0.0
    %279 = vmatpush2.msra.mxu0 0.0
    %280 = vmatprep.subr.mxu0 0.0
    %281 = vmatpush2.msra.mxu0 0.0
    %282 = vmatprep.subr.mxu0 0.0
    %283 = vmatpush2.msra.mxu0 0.0
    %284 = vmatprep.subr.mxu0 0.0
    %285 = vmatpush2.msra.mxu0 0.0
    %286 = vmatprep.subr.mxu0 0.0
    %287 = vmatpush2.msra.mxu0 0.0
    %288 = vmatprep.subr.mxu0 0.0
    %289 = vmatpush2.msra.mxu0 0.0
    %290 = vmatprep.subr.mxu0 0.0
    %291 = vmatpush2.msra.mxu0 0.0
    %292 = vmatprep.subr.mxu0 0.0
    %293 = vmatpush2.msra.mxu0 0.0
    %294 = vmatprep.subr.mxu0 0.0
    %295 = vmatpush2.msra.mxu0 0.0
    %296 = vmatprep.mubr.f32.mxu0 0.0
    %297 = vmatmul.mubr.f32.gmra.mxu0 %v224
    %v298 = vpop.f32.mrf.mxu0
    %v299 = vadd.f32 %v221, %v298
    %v300 = vpop.f32.mrf.mxu0
    %301 = vmatprep.mubr.f32.mxu0 0.0
    %302 = vmatmul.mubr.f32.gmra.mxu0 %v227
    %v303 = vpop.f32.mrf.mxu0
    %v304 = vadd.f32 %v221, %v303
    %v305 = vpop.f32.mrf.mxu0
    %306 = vmatprep.mubr.f32.mxu0 0.0
    %307 = vmatmul.mubr.f32.gmra.mxu0 %v230
    %v308 = vpop.f32.mrf.mxu0
    %v309 = vadd.f32 %v221, %v308
    %v310 = vpop.f32.mrf.mxu0
    %311 = vdwg.mxu0
    %v312 = vlaneseq
    %v313 = vand.u32 %v312, 127
    %314 = vset.pattern.permute.xlu0 0
    %315 = vperm.xlu0 %314, %v113
    %v316 = vpop.permute.xlu0 %315
    %317 = vset.pattern.permute.xlu0 0
    %318 = vperm.xlu0 %317, %v114
    %v319 = vpop.permute.xlu0 %318
    %320 = vset.pattern.permute.xlu0 0
    %321 = vperm.xlu0 %320, %v115
    %v322 = vpop.permute.xlu0 %321
    %vm323 = vcmp.eq.s32.totalorder %v313, %v316
    %vm324 = vcmp.eq.s32.totalorder %v313, %v319
    %vm325 = vcmp.eq.s32.totalorder %v313, %v322
    %v326 = vsel %vm323, 1, 0
    %v327 = vsel %vm324, 1, 0
    %v328 = vsel %vm325, 1, 0
    %v329 = vcvt.s32.f32 %v326
    %v330 = vcvt.s32.f32 %v327
    %v331 = vcvt.s32.f32 %v328
    %v332 = vadd.s32 %v116, 16
    %v333 = vadd.s32 %v117, 16
    %v334 = vadd.s32 %v118, 16
    %335 = vset.pattern.permute.xlu0 0
    %336 = vperm.xlu0 %335, %v332
    %v337 = vpop.permute.xlu0 %336
    %338 = vset.pattern.permute.xlu0 0
    %339 = vperm.xlu0 %338, %v333
    %v340 = vpop.permute.xlu0 %339
    %341 = vset.pattern.permute.xlu0 0
    %342 = vperm.xlu0 %341, %v334
    %v343 = vpop.permute.xlu0 %342
    %vm344 = vcmp.eq.s32.totalorder %v313, %v337
    %vm345 = vcmp.eq.s32.totalorder %v313, %v340
    %vm346 = vcmp.eq.s32.totalorder %v313, %v343
    %vm347 = vmor %vm323, %vm344
    %vm348 = vmor %vm324, %vm345
    %vm349 = vmor %vm325, %vm346
    %v350 = vsel %vm347, 1, 0
    %v351 = vsel %vm348, 1, 0
    %v352 = vsel %vm349, 1, 0
    %v353 = vcvt.s32.f32 %v350
    %v354 = vcvt.s32.f32 %v351
    %v355 = vcvt.s32.f32 %v352
    %v356 = vsel %vm135, %v209, 0.0
    %v357 = vsel %vm135, %v214, 0.0
    %360 = vrot.lane.b32.xlu0 %v209, 96
    %v361 = vpop.permute.xlu0 %360
    %362 = vrot.lane.b32.xlu0 %v214, 96
    %v363 = vpop.permute.xlu0 %362
    %v367 = vsel %vm135, %v353, 0
    %v370 = vsel %vm135, %v354, 0
    %v373 = vsel %vm135, %v355, 0
    %375 = vmatprep.subr.mxu0 0.0
    %376 = vmatpush1.msra.mxu0 0.0
    %377 = vmatprep.subr.mxu0 0.0
    %378 = vmatpush1.msra.mxu0 0.0
    %379 = vmatprep.subr.mxu0 0.0
    %380 = vmatpush1.msra.mxu0 0.0
    %381 = vmatprep.subr.mxu0 0.0
    %382 = vmatpush1.msra.mxu0 0.0
    %383 = vmatprep.subr.mxu0 0.0
    %384 = vmatpush1.msra.mxu0 0.0
    %385 = vmatprep.subr.mxu0 0.0
    %386 = vmatpush1.msra.mxu0 0.0
    %387 = vmatprep.subr.mxu0 0.0
    %388 = vmatpush1.msra.mxu0 0.0
    %389 = vmatprep.subr.mxu0 0.0
    %390 = vmatpush1.msra.mxu0 0.0
    %391 = vmatprep.subr.mxu0 0.0
    %392 = vmatpush1.msra.mxu0 0.0
    %393 = vmatprep.subr.mxu0 0.0
    %394 = vmatpush1.msra.mxu0 0.0
    %395 = vmatprep.subr.mxu0 0.0
    %396 = vmatpush1.msra.mxu0 0.0
    %397 = vmatprep.subr.mxu0 0.0
    %398 = vmatpush1.msra.mxu0 0.0
    %399 = vmatprep.subr.mxu0 0.0
    %400 = vmatpush1.msra.mxu0 %v363
    %401 = vmatprep.subr.mxu0 0.0
    %402 = vmatpush1.msra.mxu0 %v361
    %403 = vmatprep.subr.mxu0 0.0
    %404 = vmatpush1.msra.mxu0 %v357
    %405 = vmatprep.subr.mxu0 0.0
    %406 = vmatpush1.msra.mxu0 %v356
    %407 = vmatprep.subr.mxu0 0.0
    %408 = vmatpush2.msra.mxu0 0.0
    %409 = vmatprep.subr.mxu0 0.0
    %410 = vmatpush2.msra.mxu0 0.0
    %411 = vmatprep.subr.mxu0 0.0
    %412 = vmatpush2.msra.mxu0 0.0
    %413 = vmatprep.subr.mxu0 0.0
    %414 = vmatpush2.msra.mxu0 0.0
    %415 = vmatprep.subr.mxu0 0.0
    %416 = vmatpush2.msra.mxu0 0.0
    %417 = vmatprep.subr.mxu0 0.0
    %418 = vmatpush2.msra.mxu0 0.0
    %419 = vmatprep.subr.mxu0 0.0
    %420 = vmatpush2.msra.mxu0 0.0
    %421 = vmatprep.subr.mxu0 0.0
    %422 = vmatpush2.msra.mxu0 0.0
    %423 = vmatprep.subr.mxu0 0.0
    %424 = vmatpush2.msra.mxu0 0.0
    %425 = vmatprep.subr.mxu0 0.0
    %426 = vmatpush2.msra.mxu0 0.0
    %427 = vmatprep.subr.mxu0 0.0
    %428 = vmatpush2.msra.mxu0 0.0
    %429 = vmatprep.subr.mxu0 0.0
    %430 = vmatpush2.msra.mxu0 0.0
    %431 = vmatprep.subr.mxu0 0.0
    %432 = vmatpush2.msra.mxu0 0.0
    %433 = vmatprep.subr.mxu0 0.0
    %434 = vmatpush2.msra.mxu0 0.0
    %435 = vmatprep.subr.mxu0 0.0
    %436 = vmatpush2.msra.mxu0 0.0
    %437 = vmatprep.subr.mxu0 0.0
    %438 = vmatpush2.msra.mxu0 0.0
    %439 = vmatprep.mubr.f32.mxu0 0.0
    %440 = vmatmul.mubr.f32.gmra.mxu0 %v367
    %v441 = vpop.f32.mrf.mxu0
    %v442 = vadd.f32 0.0, %v441
    %v443 = vpop.f32.mrf.mxu0
    %444 = vmatprep.mubr.f32.mxu0 0.0
    %445 = vmatmul.mubr.f32.gmra.mxu0 %v370
    %v446 = vpop.f32.mrf.mxu0
    %v447 = vadd.f32 0.0, %v446
    %v448 = vpop.f32.mrf.mxu0
    %449 = vmatprep.mubr.f32.mxu0 0.0
    %450 = vmatmul.mubr.f32.gmra.mxu0 %v373
    %v451 = vpop.f32.mrf.mxu0
    %v452 = vadd.f32 0.0, %v451
    %v453 = vpop.f32.mrf.mxu0
    %454 = vdwg.mxu0
    %v455 = vadd.f32 %v442, %v299
    %v456 = vadd.f32 %v447, %v304
    %v457 = vadd.f32 %v452, %v309
    %v458 = vxor.u32 %v455, 2147483648
    %v459 = vxor.u32 %v456, 2147483648
    %v460 = vxor.u32 %v457, 2147483648
    %v461 = vmul.f32 %v458, 1.442695
    %v462 = vpow.pop %v461
    %v463 = vmul.f32 %v459, 1.442695
    %v464 = vpow.pop %v463
    %v465 = vmul.f32 %v460, 1.442695
    %v466 = vpow.pop %v465
    %v467 = vadd.f32 %v462, 1.0
    %v468 = vadd.f32 %v464, 1.0
    %v469 = vadd.f32 %v466, 1.0
    %v470 = vrcp.pop %v467
    %v471 = vmul.f32 1.0, %v470
    %v472 = vrcp.pop %v468
    %v473 = vmul.f32 1.0, %v472
    %v474 = vrcp.pop %v469
    %v475 = vmul.f32 1.0, %v474
    %479 = vrot.lane.b32.xlu0 %v442, 96
    %v480 = vpop.permute.xlu0 %479
    %481 = vrot.lane.b32.xlu0 %v447, 96
    %v482 = vpop.permute.xlu0 %481
    %483 = vrot.lane.b32.xlu0 %v452, 96
    %v484 = vpop.permute.xlu0 %483
    %v488 = vmul.f32 %v471, %v480
    %v489 = vmul.f32 %v473, %v482
    %v490 = vmul.f32 %v475, %v484
    %494 = vrot.lane.b32.xlu0 %v471, 32
    %v495 = vpop.permute.xlu0 %494
    %496 = vrot.lane.b32.xlu0 %v473, 32
    %v497 = vpop.permute.xlu0 %496
    %498 = vrot.lane.b32.xlu0 %v475, 32
    %v499 = vpop.permute.xlu0 %498
    %v503 = vsel %vm135, %v488, %v495
    %v504 = vsel %vm135, %v489, %v497
    %v505 = vsel %vm135, %v490, %v499
    %506 = vxpose.xlu0.b32.start [1/16] %v329, 128
    %507 = vxpose.xlu0.b32.cont [2/16] %v330, 128
    %508 = vxpose.xlu0.b32.cont [3/16] %v331, 128
    %509 = vxpose.xlu0.b32.cont [4/16] 0.0, 128
    %510 = vxpose.xlu0.b32.cont [5/16] 0.0, 128
    %511 = vxpose.xlu0.b32.cont [6/16] 0.0, 128
    %512 = vxpose.xlu0.b32.cont [7/16] 0.0, 128
    %513 = vxpose.xlu0.b32.cont [8/16] 0.0, 128
    %514 = vxpose.xlu0.b32.cont [9/16] 0.0, 128
    %515 = vxpose.xlu0.b32.cont [10/16] 0.0, 128
    %516 = vxpose.xlu0.b32.cont [11/16] 0.0, 128
    %517 = vxpose.xlu0.b32.cont [12/16] 0.0, 128
    %518 = vxpose.xlu0.b32.cont [13/16] 0.0, 128
    %519 = vxpose.xlu0.b32.cont [14/16] 0.0, 128
    %520 = vxpose.xlu0.b32.cont [15/16] 0.0, 128
    %521 = vxpose.xlu0.b32.end [16/16] 0.0, 128
    %v522 = vpop.trf.xlu0
    %v523 = vpop.trf.xlu0
    %v524 = vpop.trf.xlu0
    %v525 = vpop.trf.xlu0
    %v526 = vpop.trf.xlu0
    %v527 = vpop.trf.xlu0
    %v528 = vpop.trf.xlu0
    %v529 = vpop.trf.xlu0
    %v530 = vpop.trf.xlu0
    %v531 = vpop.trf.xlu0
    %v532 = vpop.trf.xlu0
    %v533 = vpop.trf.xlu0
    %v534 = vpop.trf.xlu0
    %v535 = vpop.trf.xlu0
    %v536 = vpop.trf.xlu0
    %v537 = vpop.trf.xlu0
    %vm538 = vcmask 195584
    %v540 = vsel %vm538, %v522, 0
    %v543 = vsel %vm538, %v523, 0
    %545 = vmatprep.subr.mxu0 0.0
    %546 = vmatpush1.msra.mxu0 0.0
    %547 = vmatprep.subr.mxu0 0.0
    %548 = vmatpush1.msra.mxu0 0.0
    %549 = vmatprep.subr.mxu0 0.0
    %550 = vmatpush1.msra.mxu0 0.0
    %551 = vmatprep.subr.mxu0 0.0
    %552 = vmatpush1.msra.mxu0 0.0
    %553 = vmatprep.subr.mxu0 0.0
    %554 = vmatpush1.msra.mxu0 0.0
    %555 = vmatprep.subr.mxu0 0.0
    %556 = vmatpush1.msra.mxu0 0.0
    %557 = vmatprep.subr.mxu0 0.0
    %558 = vmatpush1.msra.mxu0 0.0
    %559 = vmatprep.subr.mxu0 0.0
    %560 = vmatpush1.msra.mxu0 0.0
    %561 = vmatprep.subr.mxu0 0.0
    %562 = vmatpush1.msra.mxu0 0.0
    %563 = vmatprep.subr.mxu0 0.0
    %564 = vmatpush1.msra.mxu0 0.0
    %565 = vmatprep.subr.mxu0 0.0
    %566 = vmatpush1.msra.mxu0 0.0
    %567 = vmatprep.subr.mxu0 0.0
    %568 = vmatpush1.msra.mxu0 0.0
    %569 = vmatprep.subr.mxu0 0.0
    %570 = vmatpush1.msra.mxu0 0.0
    %571 = vmatprep.subr.mxu0 0.0
    %572 = vmatpush1.msra.mxu0 %v505
    %573 = vmatprep.subr.mxu0 0.0
    %574 = vmatpush1.msra.mxu0 %v504
    %575 = vmatprep.subr.mxu0 0.0
    %576 = vmatpush1.msra.mxu0 %v503
    %577 = vmatprep.subr.mxu0 0.0
    %578 = vmatpush2.msra.mxu0 0.0
    %579 = vmatprep.subr.mxu0 0.0
    %580 = vmatpush2.msra.mxu0 0.0
    %581 = vmatprep.subr.mxu0 0.0
    %582 = vmatpush2.msra.mxu0 0.0
    %583 = vmatprep.subr.mxu0 0.0
    %584 = vmatpush2.msra.mxu0 0.0
    %585 = vmatprep.subr.mxu0 0.0
    %586 = vmatpush2.msra.mxu0 0.0
    %587 = vmatprep.subr.mxu0 0.0
    %588 = vmatpush2.msra.mxu0 0.0
    %589 = vmatprep.subr.mxu0 0.0
    %590 = vmatpush2.msra.mxu0 0.0
    %591 = vmatprep.subr.mxu0 0.0
    %592 = vmatpush2.msra.mxu0 0.0
    %593 = vmatprep.subr.mxu0 0.0
    %594 = vmatpush2.msra.mxu0 0.0
    %595 = vmatprep.subr.mxu0 0.0
    %596 = vmatpush2.msra.mxu0 0.0
    %597 = vmatprep.subr.mxu0 0.0
    %598 = vmatpush2.msra.mxu0 0.0
    %599 = vmatprep.subr.mxu0 0.0
    %600 = vmatpush2.msra.mxu0 0.0
    %601 = vmatprep.subr.mxu0 0.0
    %602 = vmatpush2.msra.mxu0 0.0
    %603 = vmatprep.subr.mxu0 0.0
    %604 = vmatpush2.msra.mxu0 0.0
    %605 = vmatprep.subr.mxu0 0.0
    %606 = vmatpush2.msra.mxu0 0.0
    %607 = vmatprep.subr.mxu0 0.0
    %608 = vmatpush2.msra.mxu0 0.0
    %609 = vmatprep.mubr.f32.mxu0 0.0
    %610 = vmatmul.mubr.f32.gmra.mxu0 %v540
    %v611 = vpop.f32.mrf.mxu0
    %v612 = vadd.f32 0.0, %v611
    %v613 = vpop.f32.mrf.mxu0
    %614 = vmatprep.mubr.f32.mxu0 0.0
    %615 = vmatmul.mubr.f32.gmra.mxu0 %v543
    %v616 = vpop.f32.mrf.mxu0
    %v617 = vadd.f32 0.0, %v616
    %v618 = vpop.f32.mrf.mxu0
    %619 = vdwg.mxu0
    %v620 = vadd.f32 %v612, 1e-06
    %v621 = vadd.f32 %v617, 1e-06
    %v622 = vrcp.pop %v620
    %v623 = vrcp.pop %v621
    %v624 = vmul.f32 %v620, %v622
    %v625 = vmul.f32 %v621, %v623
    %v626 = vsub.f32 2.0, %v624
    %v627 = vsub.f32 2.0, %v625
    %v628 = vmul.f32 %v622, %v626
    %v629 = vmul.f32 %v623, %v627
    %632 = vrot.lane.b32.xlu0 %v628, 96
    %v633 = vpop.permute.xlu0 %632
    %634 = vrot.lane.b32.xlu0 %v629, 96
    %v635 = vpop.permute.xlu0 %634
    %v638 = vmul.f32 %v612, %v633
    %v639 = vmul.f32 %v617, %v635
    %642 = vrot.lane.b32.xlu0 %v638, 96
    %v643 = vpop.permute.xlu0 %642
    %644 = vrot.lane.b32.xlu0 %v639, 96
    %v645 = vpop.permute.xlu0 %644
    %v648 = vadd.f32 %v209, %v643
    %v649 = vadd.f32 %v214, %v645
    %v650 = vmul.f32 %v648, 0.999995
    %v651 = vmul.f32 %v649, 0.999995
    %v652 = vxor.u32 %v650, 2147483648
    %v653 = vxor.u32 %v651, 2147483648
    %v654 = vmul.f32 %v652, 1.442695
    %v655 = vpow.pop %v654
    %v656 = vmul.f32 %v653, 1.442695
    %v657 = vpow.pop %v656
    %v658 = vadd.f32 %v655, 1.0
    %v659 = vadd.f32 %v657, 1.0
    %v660 = vrcp.pop %v658
    %v661 = vmul.f32 1.0, %v660
    %v662 = vrcp.pop %v659
    %v663 = vmul.f32 1.0, %v662
    %v664 = vmul.f32 %v650, %v661
    %v665 = vmul.f32 %v651, %v663
    %668 = vrot.lane.b32.xlu0 %v664, 32
    %v669 = vpop.permute.xlu0 %668
    %670 = vrot.lane.b32.xlu0 %v665, 32
    %v671 = vpop.permute.xlu0 %670
    %v674 = vadd.f32 %v108, %v669
    %v675 = vadd.f32 %v109, %v671
    %v676 = vmul.f32 %v455, 0.999995
    %v677 = vmul.f32 %v456, 0.999995
    %v678 = vmul.f32 %v457, 0.999995
    %v679 = vxor.u32 %v676, 2147483648
    %v680 = vxor.u32 %v677, 2147483648
    %v681 = vxor.u32 %v678, 2147483648
    %v682 = vmul.f32 %v679, 1.442695
    %v683 = vpow.pop %v682
    %v684 = vmul.f32 %v680, 1.442695
    %v685 = vpow.pop %v684
    %v686 = vmul.f32 %v681, 1.442695
    %v687 = vpow.pop %v686
    %v688 = vadd.f32 %v683, 1.0
    %v689 = vadd.f32 %v685, 1.0
    %v690 = vadd.f32 %v687, 1.0
    %v691 = vrcp.pop %v688
    %v692 = vmul.f32 1.0, %v691
    %v693 = vrcp.pop %v689
    %v694 = vmul.f32 1.0, %v693
    %v695 = vrcp.pop %v690
    %v696 = vmul.f32 1.0, %v695
    %v697 = vmul.f32 %v676, %v692
    %v698 = vmul.f32 %v677, %v694
    %v699 = vmul.f32 %v678, %v696
    %v700 = vadd.f32 %v110, %v697
    %v701 = vadd.f32 %v111, %v698
    %v702 = vadd.f32 %v112, %v699
    %v703 = vld [vmem:[#allocation2] sm:$0xff]
    %v704 = vld [vmem:[%s5] sm:$0xff]
    %v705 = vld [vmem:[%s5 + $0x8] sm:$0xff]
    %v706 = vld [vmem:[%s6] sm:$0xff]
    %v707 = vld [vmem:[%s6 + $0x8] sm:$0xff]
    %v708 = vld [vmem:[%s11] sm:$0xff]
    %v709 = vld [vmem:[%s11 + $0x8] sm:$0xff]
    %v710 = vld [vmem:[%s11 + $0x10] sm:$0xff]
    %v711 = vld [vmem:[%s11 + $0x18] sm:$0xff]
    %v712 = vld [vmem:[%s12] sm:$0x1]
    %v713 = vld [vmem:[#allocation8] sm:$0xff]
    %v714 = vld [vmem:[#allocation8 + $0x8] sm:$0xff]
    %v715 = vld [vmem:[#allocation8 + $0x10] sm:$0xff]
    %v716 = vld [vmem:[#allocation8 + $0x18] sm:$0xff]
    %v717 = vld [vmem:[%s14] sm:$0x1]
    %v719 = vlaneseq
    %v720 = vshrl.u32 %v719, 7
    %v721 = vsub.s32 0, %v720
    %v722 = vrot.slane %v712, %v721
    %v725 = vsel %vm135, %v703, 0
    %727 = vmatprep.subr.mxu0 0.0
    %728 = vmatpush1.msra.mxu0 0.0
    %729 = vmatprep.subr.mxu0 0.0
    %730 = vmatpush1.msra.mxu0 0.0
    %731 = vmatprep.subr.mxu0 0.0
    %732 = vmatpush1.msra.mxu0 0.0
    %733 = vmatprep.subr.mxu0 0.0
    %734 = vmatpush1.msra.mxu0 0.0
    %735 = vmatprep.subr.mxu0 0.0
    %736 = vmatpush1.msra.mxu0 0.0
    %737 = vmatprep.subr.mxu0 0.0
    %738 = vmatpush1.msra.mxu0 0.0
    %739 = vmatprep.subr.mxu0 0.0
    %740 = vmatpush1.msra.mxu0 0.0
    %741 = vmatprep.subr.mxu0 0.0
    %742 = vmatpush1.msra.mxu0 0.0
    %743 = vmatprep.subr.mxu0 0.0
    %744 = vmatpush1.msra.mxu0 0.0
    %745 = vmatprep.subr.mxu0 0.0
    %746 = vmatpush1.msra.mxu0 0.0
    %747 = vmatprep.subr.mxu0 0.0
    %748 = vmatpush1.msra.mxu0 0.0
    %749 = vmatprep.subr.mxu0 0.0
    %750 = vmatpush1.msra.mxu0 0.0
    %751 = vmatprep.subr.mxu0 0.0
    %752 = vmatpush1.msra.mxu0 %v711
    %753 = vmatprep.subr.mxu0 0.0
    %754 = vmatpush1.msra.mxu0 %v710
    %755 = vmatprep.subr.mxu0 0.0
    %756 = vmatpush1.msra.mxu0 %v709
    %757 = vmatprep.subr.mxu0 0.0
    %758 = vmatpush1.msra.mxu0 %v708
    %759 = vmatprep.subr.mxu0 0.0
    %760 = vmatpush2.msra.mxu0 0.0
    %761 = vmatprep.subr.mxu0 0.0
    %762 = vmatpush2.msra.mxu0 0.0
    %763 = vmatprep.subr.mxu0 0.0
    %764 = vmatpush2.msra.mxu0 0.0
    %765 = vmatprep.subr.mxu0 0.0
    %766 = vmatpush2.msra.mxu0 0.0
    %767 = vmatprep.subr.mxu0 0.0
    %768 = vmatpush2.msra.mxu0 0.0
    %769 = vmatprep.subr.mxu0 0.0
    %770 = vmatpush2.msra.mxu0 0.0
    %771 = vmatprep.subr.mxu0 0.0
    %772 = vmatpush2.msra.mxu0 0.0
    %773 = vmatprep.subr.mxu0 0.0
    %774 = vmatpush2.msra.mxu0 0.0
    %775 = vmatprep.subr.mxu0 0.0
    %776 = vmatpush2.msra.mxu0 0.0
    %777 = vmatprep.subr.mxu0 0.0
    %778 = vmatpush2.msra.mxu0 0.0
    %779 = vmatprep.subr.mxu0 0.0
    %780 = vmatpush2.msra.mxu0 0.0
    %781 = vmatprep.subr.mxu0 0.0
    %782 = vmatpush2.msra.mxu0 0.0
    %783 = vmatprep.subr.mxu0 0.0
    %784 = vmatpush2.msra.mxu0 0.0
    %785 = vmatprep.subr.mxu0 0.0
    %786 = vmatpush2.msra.mxu0 0.0
    %787 = vmatprep.subr.mxu0 0.0
    %788 = vmatpush2.msra.mxu0 0.0
    %789 = vmatprep.subr.mxu0 0.0
    %790 = vmatpush2.msra.mxu0 0.0
    %791 = vmatprep.mubr.f32.mxu0 0.0
    %792 = vmatmul.mubr.f32.gmra.mxu0 %v725
    %v793 = vpop.f32.mrf.mxu0
    %v794 = vadd.f32 %v722, %v793
    %v795 = vpop.f32.mrf.mxu0
    %796 = vdwg.mxu0
    %v798 = vlaneseq
    %v799 = vshrl.u32 %v798, 7
    %v800 = vsub.s32 0, %v799
    %v801 = vrot.slane %v717, %v800
    %v804 = vsel %vm135, %v674, 0
    %v807 = vsel %vm135, %v675, 0
    %809 = vmatprep.subr.mxu0 0.0
    %810 = vmatpush1.msra.mxu0 0.0
    %811 = vmatprep.subr.mxu0 0.0
    %812 = vmatpush1.msra.mxu0 0.0
    %813 = vmatprep.subr.mxu0 0.0
    %814 = vmatpush1.msra.mxu0 0.0
    %815 = vmatprep.subr.mxu0 0.0
    %816 = vmatpush1.msra.mxu0 0.0
    %817 = vmatprep.subr.mxu0 0.0
    %818 = vmatpush1.msra.mxu0 0.0
    %819 = vmatprep.subr.mxu0 0.0
    %820 = vmatpush1.msra.mxu0 0.0
    %821 = vmatprep.subr.mxu0 0.0
    %822 = vmatpush1.msra.mxu0 0.0
    %823 = vmatprep.subr.mxu0 0.0
    %824 = vmatpush1.msra.mxu0 0.0
    %825 = vmatprep.subr.mxu0 0.0
    %826 = vmatpush1.msra.mxu0 0.0
    %827 = vmatprep.subr.mxu0 0.0
    %828 = vmatpush1.msra.mxu0 0.0
    %829 = vmatprep.subr.mxu0 0.0
    %830 = vmatpush1.msra.mxu0 0.0
    %831 = vmatprep.subr.mxu0 0.0
    %832 = vmatpush1.msra.mxu0 0.0
    %833 = vmatprep.subr.mxu0 0.0
    %834 = vmatpush1.msra.mxu0 %v716
    %835 = vmatprep.subr.mxu0 0.0
    %836 = vmatpush1.msra.mxu0 %v715
    %837 = vmatprep.subr.mxu0 0.0
    %838 = vmatpush1.msra.mxu0 %v714
    %839 = vmatprep.subr.mxu0 0.0
    %840 = vmatpush1.msra.mxu0 %v713
    %841 = vmatprep.subr.mxu0 0.0
    %842 = vmatpush2.msra.mxu0 0.0
    %843 = vmatprep.subr.mxu0 0.0
    %844 = vmatpush2.msra.mxu0 0.0
    %845 = vmatprep.subr.mxu0 0.0
    %846 = vmatpush2.msra.mxu0 0.0
    %847 = vmatprep.subr.mxu0 0.0
    %848 = vmatpush2.msra.mxu0 0.0
    %849 = vmatprep.subr.mxu0 0.0
    %850 = vmatpush2.msra.mxu0 0.0
    %851 = vmatprep.subr.mxu0 0.0
    %852 = vmatpush2.msra.mxu0 0.0
    %853 = vmatprep.subr.mxu0 0.0
    %854 = vmatpush2.msra.mxu0 0.0
    %855 = vmatprep.subr.mxu0 0.0
    %856 = vmatpush2.msra.mxu0 0.0
    %857 = vmatprep.subr.mxu0 0.0
    %858 = vmatpush2.msra.mxu0 0.0
    %859 = vmatprep.subr.mxu0 0.0
    %860 = vmatpush2.msra.mxu0 0.0
    %861 = vmatprep.subr.mxu0 0.0
    %862 = vmatpush2.msra.mxu0 0.0
    %863 = vmatprep.subr.mxu0 0.0
    %864 = vmatpush2.msra.mxu0 0.0
    %865 = vmatprep.subr.mxu0 0.0
    %866 = vmatpush2.msra.mxu0 0.0
    %867 = vmatprep.subr.mxu0 0.0
    %868 = vmatpush2.msra.mxu0 0.0
    %869 = vmatprep.subr.mxu0 0.0
    %870 = vmatpush2.msra.mxu0 0.0
    %871 = vmatprep.subr.mxu0 0.0
    %872 = vmatpush2.msra.mxu0 0.0
    %873 = vmatprep.mubr.f32.mxu0 0.0
    %874 = vmatmul.mubr.f32.gmra.mxu0 %v804
    %v875 = vpop.f32.mrf.mxu0
    %v876 = vadd.f32 %v801, %v875
    %v877 = vpop.f32.mrf.mxu0
    %878 = vmatprep.mubr.f32.mxu0 0.0
    %879 = vmatmul.mubr.f32.gmra.mxu0 %v807
    %v880 = vpop.f32.mrf.mxu0
    %v881 = vadd.f32 %v801, %v880
    %v882 = vpop.f32.mrf.mxu0
    %883 = vdwg.mxu0
    %884 = vset.pattern.permute.xlu0 0
    %885 = vperm.xlu0 %884, %v704
    %v886 = vpop.permute.xlu0 %885
    %887 = vset.pattern.permute.xlu0 0
    %888 = vperm.xlu0 %887, %v705
    %v889 = vpop.permute.xlu0 %888
    %vm890 = vcmp.eq.s32.totalorder %v313, %v886
    %vm891 = vcmp.eq.s32.totalorder %v313, %v889
    %v892 = vsel %vm890, 1, 0
    %v893 = vsel %vm891, 1, 0
    %v894 = vcvt.s32.f32 %v892
    %v895 = vcvt.s32.f32 %v893
    %v896 = vadd.s32 %v706, 8
    %v897 = vadd.s32 %v707, 8
    %898 = vset.pattern.permute.xlu0 0
    %899 = vperm.xlu0 %898, %v896
    %v900 = vpop.permute.xlu0 %899
    %901 = vset.pattern.permute.xlu0 0
    %902 = vperm.xlu0 %901, %v897
    %v903 = vpop.permute.xlu0 %902
    %vm904 = vcmp.eq.s32.totalorder %v313, %v900
    %vm905 = vcmp.eq.s32.totalorder %v313, %v903
    %vm906 = vmor %vm890, %vm904
    %vm907 = vmor %vm891, %vm905
    %v908 = vsel %vm906, 1, 0
    %v909 = vsel %vm907, 1, 0
    %v910 = vcvt.s32.f32 %v908
    %v911 = vcvt.s32.f32 %v909
    %v912 = vsel %vm135, %v794, 0.0
    %914 = vrot.lane.b32.xlu0 %v794, 96
    %v915 = vpop.permute.xlu0 %914
    %vm917 = vcmask 130048
    %v919 = vsel %vm917, %v910, 0
    %v922 = vsel %vm917, %v911, 0
    %924 = vmatprep.subr.mxu0 0.0
    %925 = vmatpush1.msra.mxu0 0.0
    %926 = vmatprep.subr.mxu0 0.0
    %927 = vmatpush1.msra.mxu0 0.0
    %928 = vmatprep.subr.mxu0 0.0
    %929 = vmatpush1.msra.mxu0 0.0
    %930 = vmatprep.subr.mxu0 0.0
    %931 = vmatpush1.msra.mxu0 0.0
    %932 = vmatprep.subr.mxu0 0.0
    %933 = vmatpush1.msra.mxu0 0.0
    %934 = vmatprep.subr.mxu0 0.0
    %935 = vmatpush1.msra.mxu0 0.0
    %936 = vmatprep.subr.mxu0 0.0
    %937 = vmatpush1.msra.mxu0 0.0
    %938 = vmatprep.subr.mxu0 0.0
    %939 = vmatpush1.msra.mxu0 0.0
    %940 = vmatprep.subr.mxu0 0.0
    %941 = vmatpush1.msra.mxu0 0.0
    %942 = vmatprep.subr.mxu0 0.0
    %943 = vmatpush1.msra.mxu0 0.0
    %944 = vmatprep.subr.mxu0 0.0
    %945 = vmatpush1.msra.mxu0 0.0
    %946 = vmatprep.subr.mxu0 0.0
    %947 = vmatpush1.msra.mxu0 0.0
    %948 = vmatprep.subr.mxu0 0.0
    %949 = vmatpush1.msra.mxu0 0.0
    %950 = vmatprep.subr.mxu0 0.0
    %951 = vmatpush1.msra.mxu0 0.0
    %952 = vmatprep.subr.mxu0 0.0
    %953 = vmatpush1.msra.mxu0 %v915
    %954 = vmatprep.subr.mxu0 0.0
    %955 = vmatpush1.msra.mxu0 %v912
    %956 = vmatprep.subr.mxu0 0.0
    %957 = vmatpush2.msra.mxu0 0.0
    %958 = vmatprep.subr.mxu0 0.0
    %959 = vmatpush2.msra.mxu0 0.0
    %960 = vmatprep.subr.mxu0 0.0
    %961 = vmatpush2.msra.mxu0 0.0
    %962 = vmatprep.subr.mxu0 0.0
    %963 = vmatpush2.msra.mxu0 0.0
    %964 = vmatprep.subr.mxu0 0.0
    %965 = vmatpush2.msra.mxu0 0.0
    %966 = vmatprep.subr.mxu0 0.0
    %967 = vmatpush2.msra.mxu0 0.0
    %968 = vmatprep.subr.mxu0 0.0
    %969 = vmatpush2.msra.mxu0 0.0
    %970 = vmatprep.subr.mxu0 0.0
    %971 = vmatpush2.msra.mxu0 0.0
    %972 = vmatprep.subr.mxu0 0.0
    %973 = vmatpush2.msra.mxu0 0.0
    %974 = vmatprep.subr.mxu0 0.0
    %975 = vmatpush2.msra.mxu0 0.0
    %976 = vmatprep.subr.mxu0 0.0
    %977 = vmatpush2.msra.mxu0 0.0
    %978 = vmatprep.subr.mxu0 0.0
    %979 = vmatpush2.msra.mxu0 0.0
    %980 = vmatprep.subr.mxu0 0.0
    %981 = vmatpush2.msra.mxu0 0.0
    %982 = vmatprep.subr.mxu0 0.0
    %983 = vmatpush2.msra.mxu0 0.0
    %984 = vmatprep.subr.mxu0 0.0
    %985 = vmatpush2.msra.mxu0 0.0
    %986 = vmatprep.subr.mxu0 0.0
    %987 = vmatpush2.msra.mxu0 0.0
    %988 = vmatprep.mubr.f32.mxu0 0.0
    %989 = vmatmul.mubr.f32.gmra.mxu0 %v919
    %v990 = vpop.f32.mrf.mxu0
    %v991 = vadd.f32 0.0, %v990
    %v992 = vpop.f32.mrf.mxu0
    %993 = vmatprep.mubr.f32.mxu0 0.0
    %994 = vmatmul.mubr.f32.gmra.mxu0 %v922
    %v995 = vpop.f32.mrf.mxu0
    %v996 = vadd.f32 0.0, %v995
    %v997 = vpop.f32.mrf.mxu0
    %998 = vdwg.mxu0
    %v999 = vadd.f32 %v991, %v876
    %v1000 = vadd.f32 %v996, %v881
    %v1001 = vxor.u32 %v999, 2147483648
    %v1002 = vxor.u32 %v1000, 2147483648
    %v1003 = vmul.f32 %v1001, 1.442695
    %v1004 = vpow.pop %v1003
    %v1005 = vmul.f32 %v1002, 1.442695
    %v1006 = vpow.pop %v1005
    %v1007 = vadd.f32 %v1004, 1.0
    %v1008 = vadd.f32 %v1006, 1.0
    %v1009 = vrcp.pop %v1007
    %v1010 = vmul.f32 1.0, %v1009
    %v1011 = vrcp.pop %v1008
    %v1012 = vmul.f32 1.0, %v1011
    %1015 = vrot.lane.b32.xlu0 %v991, 96
    %v1016 = vpop.permute.xlu0 %1015
    %1017 = vrot.lane.b32.xlu0 %v996, 96
    %v1018 = vpop.permute.xlu0 %1017
    %v1021 = vmul.f32 %v1010, %v1016
    %v1022 = vmul.f32 %v1012, %v1018
    %1025 = vrot.lane.b32.xlu0 %v1010, 32
    %v1026 = vpop.permute.xlu0 %1025
    %1027 = vrot.lane.b32.xlu0 %v1012, 32
    %v1028 = vpop.permute.xlu0 %1027
    %v1031 = vsel %vm135, %v1021, %v1026
    %v1032 = vsel %vm135, %v1022, %v1028
    %1033 = vxpose.xlu0.b32.start [1/16] %v894, 128
    %1034 = vxpose.xlu0.b32.cont [2/16] %v895, 128
    %1035 = vxpose.xlu0.b32.cont [3/16] 0.0, 128
    %1036 = vxpose.xlu0.b32.cont [4/16] 0.0, 128
    %1037 = vxpose.xlu0.b32.cont [5/16] 0.0, 128
    %1038 = vxpose.xlu0.b32.cont [6/16] 0.0, 128
    %1039 = vxpose.xlu0.b32.cont [7/16] 0.0, 128
    %1040 = vxpose.xlu0.b32.cont [8/16] 0.0, 128
    %1041 = vxpose.xlu0.b32.cont [9/16] 0.0, 128
    %1042 = vxpose.xlu0.b32.cont [10/16] 0.0, 128
    %1043 = vxpose.xlu0.b32.cont [11/16] 0.0, 128
    %1044 = vxpose.xlu0.b32.cont [12/16] 0.0, 128
    %1045 = vxpose.xlu0.b32.cont [13/16] 0.0, 128
    %1046 = vxpose.xlu0.b32.cont [14/16] 0.0, 128
    %1047 = vxpose.xlu0.b32.cont [15/16] 0.0, 128
    %1048 = vxpose.xlu0.b32.end [16/16] 0.0, 128
    %v1049 = vpop.trf.xlu0
    %v1050 = vpop.trf.xlu0
    %v1051 = vpop.trf.xlu0
    %v1052 = vpop.trf.xlu0
    %v1053 = vpop.trf.xlu0
    %v1054 = vpop.trf.xlu0
    %v1055 = vpop.trf.xlu0
    %v1056 = vpop.trf.xlu0
    %v1057 = vpop.trf.xlu0
    %v1058 = vpop.trf.xlu0
    %v1059 = vpop.trf.xlu0
    %v1060 = vpop.trf.xlu0
    %v1061 = vpop.trf.xlu0
    %v1062 = vpop.trf.xlu0
    %v1063 = vpop.trf.xlu0
    %v1064 = vpop.trf.xlu0
    %v1066 = vsel %vm917, %v1049, 0
    %1068 = vmatprep.subr.mxu0 0.0
    %1069 = vmatpush1.msra.mxu0 0.0
    %1070 = vmatprep.subr.mxu0 0.0
    %1071 = vmatpush1.msra.mxu0 0.0
    %1072 = vmatprep.subr.mxu0 0.0
    %1073 = vmatpush1.msra.mxu0 0.0
    %1074 = vmatprep.subr.mxu0 0.0
    %1075 = vmatpush1.msra.mxu0 0.0
    %1076 = vmatprep.subr.mxu0 0.0
    %1077 = vmatpush1.msra.mxu0 0.0
    %1078 = vmatprep.subr.mxu0 0.0
    %1079 = vmatpush1.msra.mxu0 0.0
    %1080 = vmatprep.subr.mxu0 0.0
    %1081 = vmatpush1.msra.mxu0 0.0
    %1082 = vmatprep.subr.mxu0 0.0
    %1083 = vmatpush1.msra.mxu0 0.0
    %1084 = vmatprep.subr.mxu0 0.0
    %1085 = vmatpush1.msra.mxu0 0.0
    %1086 = vmatprep.subr.mxu0 0.0
    %1087 = vmatpush1.msra.mxu0 0.0
    %1088 = vmatprep.subr.mxu0 0.0
    %1089 = vmatpush1.msra.mxu0 0.0
    %1090 = vmatprep.subr.mxu0 0.0
    %1091 = vmatpush1.msra.mxu0 0.0
    %1092 = vmatprep.subr.mxu0 0.0
    %1093 = vmatpush1.msra.mxu0 0.0
    %1094 = vmatprep.subr.mxu0 0.0
    %1095 = vmatpush1.msra.mxu0 0.0
    %1096 = vmatprep.subr.mxu0 0.0
    %1097 = vmatpush1.msra.mxu0 %v1032
    %1098 = vmatprep.subr.mxu0 0.0
    %1099 = vmatpush1.msra.mxu0 %v1031
    %1100 = vmatprep.subr.mxu0 0.0
    %1101 = vmatpush2.msra.mxu0 0.0
    %1102 = vmatprep.subr.mxu0 0.0
    %1103 = vmatpush2.msra.mxu0 0.0
    %1104 = vmatprep.subr.mxu0 0.0
    %1105 = vmatpush2.msra.mxu0 0.0
    %1106 = vmatprep.subr.mxu0 0.0
    %1107 = vmatpush2.msra.mxu0 0.0
    %1108 = vmatprep.subr.mxu0 0.0
    %1109 = vmatpush2.msra.mxu0 0.0
    %1110 = vmatprep.subr.mxu0 0.0
    %1111 = vmatpush2.msra.mxu0 0.0
    %1112 = vmatprep.subr.mxu0 0.0
    %1113 = vmatpush2.msra.mxu0 0.0
    %1114 = vmatprep.subr.mxu0 0.0
    %1115 = vmatpush2.msra.mxu0 0.0
    %1116 = vmatprep.subr.mxu0 0.0
    %1117 = vmatpush2.msra.mxu0 0.0
    %1118 = vmatprep.subr.mxu0 0.0
    %1119 = vmatpush2.msra.mxu0 0.0
    %1120 = vmatprep.subr.mxu0 0.0
    %1121 = vmatpush2.msra.mxu0 0.0
    %1122 = vmatprep.subr.mxu0 0.0
    %1123 = vmatpush2.msra.mxu0 0.0
    %1124 = vmatprep.subr.mxu0 0.0
    %1125 = vmatpush2.msra.mxu0 0.0
    %1126 = vmatprep.subr.mxu0 0.0
    %1127 = vmatpush2.msra.mxu0 0.0
    %1128 = vmatprep.subr.mxu0 0.0
    %1129 = vmatpush2.msra.mxu0 0.0
    %1130 = vmatprep.subr.mxu0 0.0
    %1131 = vmatpush2.msra.mxu0 0.0
    %1132 = vmatprep.mubr.f32.mxu0 0.0
    %1133 = vmatmul.mubr.f32.gmra.mxu0 %v1066
    %v1134 = vpop.f32.mrf.mxu0
    %v1135 = vadd.f32 0.0, %v1134
    %v1136 = vpop.f32.mrf.mxu0
    %1137 = vdwg.mxu0
    %v1138 = vadd.f32 %v1135, 1e-06
    %v1139 = vrcp.pop %v1138
    %v1140 = vmul.f32 %v1138, %v1139
    %v1141 = vsub.f32 2.0, %v1140
    %v1142 = vmul.f32 %v1139, %v1141
    %1144 = vrot.lane.b32.xlu0 %v1142, 96
    %v1145 = vpop.permute.xlu0 %1144
    %v1147 = vmul.f32 %v1135, %v1145
    %1149 = vrot.lane.b32.xlu0 %v1147, 96
    %v1150 = vpop.permute.xlu0 %1149
    %v1152 = vadd.f32 %v794, %v1150
    %v1153 = vmul.f32 %v1152, 0.999995
    %v1154 = vxor.u32 %v1153, 2147483648
    %v1155 = vmul.f32 %v1154, 1.442695
    %v1156 = vpow.pop %v1155
    %v1157 = vadd.f32 %v1156, 1.0
    %v1158 = vrcp.pop %v1157
    %v1159 = vmul.f32 1.0, %v1158
    %v1160 = vmul.f32 %v1153, %v1159
    %1162 = vrot.lane.b32.xlu0 %v1160, 32
    %v1163 = vpop.permute.xlu0 %1162
    %v1165 = vadd.f32 %v703, %v1163
    %v1166 = vmul.f32 %v999, 0.999995
    %v1167 = vmul.f32 %v1000, 0.999995
    %v1168 = vxor.u32 %v1166, 2147483648
    %v1169 = vxor.u32 %v1167, 2147483648
    %v1170 = vmul.f32 %v1168, 1.442695
    %v1171 = vpow.pop %v1170
    %v1172 = vmul.f32 %v1169, 1.442695
    %v1173 = vpow.pop %v1172
    %v1174 = vadd.f32 %v1171, 1.0
    %v1175 = vadd.f32 %v1173, 1.0
    %v1176 = vrcp.pop %v1174
    %v1177 = vmul.f32 1.0, %v1176
    %v1178 = vrcp.pop %v1175
    %v1179 = vmul.f32 1.0, %v1178
    %v1180 = vmul.f32 %v1166, %v1177
    %v1181 = vmul.f32 %v1167, %v1179
    %v1182 = vadd.f32 %v674, %v1180
    %v1183 = vadd.f32 %v675, %v1181
    %1184 = vst.msk [vmem:[#allocation10] sm:$0xff] %vm135, %v1165
    %1185 = vst.msk [vmem:[#allocation11] sm:$0xff] %vm135, %v1182
    %1186 = vst.msk [vmem:[#allocation11 + $0x8] sm:$0xff] %vm135, %v1183
    %1187 = vst.msk [vmem:[#allocation13] sm:$0xff] %vm135, %v700
    %1188 = vst.msk [vmem:[#allocation13 + $0x8] sm:$0xff] %vm135, %v701
    %1189 = vst.msk [vmem:[#allocation13 + $0x10] sm:$0xff] %vm135, %v702
    // Predicated region
    $region78: #{tpu_custom_call.1} parent=1 // pred_check
      _
    $region79: #{tpu_custom_call.1} parent=1 // pred_check_branch
      %1191 = sbr.rel (0) target = $region81
    $region80: #{tpu_custom_call.1} parent=1 // pred_region
      %s1193 = ssub.s32 128, 128
      %1194 = vsyncadd [#allocation4], %s1193
      %s1196 = sshll.u32 [#allocation10], 4
      %s1197 = int_to_ptr.vmem [resolvable:$true] %s1196
      %1199 = dma.vmem_to_hbm [thread:$0]  %s1197, 128, %s15, [#allocation4]
    $region81: #{tpu_custom_call.1} parent=1 // pred_fallthru
      _
    // Predicated region
    $region82: #{tpu_custom_call.1} parent=1 // pred_check
      _
    $region83: #{tpu_custom_call.1} parent=1 // pred_check_branch
      %1201 = sbr.rel (0) target = $region85
    $region84: #{tpu_custom_call.1} parent=1 // pred_region
      %s1203 = ssub.s32 256, 256
      %1204 = vsyncadd [#allocation12], %s1203
      %s1205 = sshll.u32 [#allocation11], 4
      %s1206 = int_to_ptr.vmem [resolvable:$true] %s1205
      %1211 = dma.vmem_to_hbm [thread:$0]  %s1206, 256, %s16, [#allocation12], 128, 128, 8
    $region85: #{tpu_custom_call.1} parent=1 // pred_fallthru
      _
    // Predicated region
    $region86: #{tpu_custom_call.1} parent=1 // pred_check
      _
    $region87: #{tpu_custom_call.1} parent=1 // pred_check_branch
      %1213 = sbr.rel (0) target = $region89
    $region88: #{tpu_custom_call.1} parent=1 // pred_region
      %s1215 = ssub.s32 384, 384
      %1216 = vsyncadd [#allocation12], %s1215
      %s1217 = sshll.u32 [#allocation13], 4
      %s1218 = int_to_ptr.vmem [resolvable:$true] %s1217
      %1223 = dma.vmem_to_hbm [thread:$0]  %s1218, 384, %s17, [#allocation12], 128, 128, 8
    $region89: #{tpu_custom_call.1} parent=1 // pred_fallthru
      _
    // Predicated region
    $region90: #{tpu_custom_call.1} parent=1 // pred_check
      _
    $region91: #{tpu_custom_call.1} parent=1 // pred_check_branch
      %1225 = sbr.rel (0) target = $region93
    $region92: #{tpu_custom_call.1} parent=1 // pred_region
      %1226 = dma.done [#allocation4], 128
    $region93: #{tpu_custom_call.1} parent=1 // pred_fallthru
      _
    // Predicated region
    $region94: #{tpu_custom_call.1} parent=1 // pred_check
      _
    $region95: #{tpu_custom_call.1} parent=1 // pred_check_branch
      %1228 = sbr.rel (0) target = $region97
    $region96: #{tpu_custom_call.1} parent=1 // pred_region
      %1229 = dma.done [#allocation12], 256
    $region97: #{tpu_custom_call.1} parent=1 // pred_fallthru
      _
    // Predicated region
    $region98: #{tpu_custom_call.1} parent=1 // pred_check
      _
    $region99: #{tpu_custom_call.1} parent=1 // pred_check_branch
      %1231 = sbr.rel (0) target = $region101
    $region100: #{tpu_custom_call.1} parent=1 // pred_region
      %1232 = dma.done [#allocation12], 384
    $region101: #{tpu_custom_call.1} parent=1 // pred_fallthru
      _
    %1233 = vsyncpa [#allocation3], 1
    %1234 = vsyncpa [#allocation6], 1
    %1235 = vsyncpa [#allocation9], 1
    %1236 = vsyncpa [#allocation4], 1
    %1237 = vsyncpa [#allocation12], 1

</llo_original>
